<compile_context>
chip_gen: v6e
topology: v6e:2x2x1
jax: 0.10.0
libtpu: 0.0.40
codegen_flags: <defaults>
</compile_context>

<pallas_src>
import functools
import math

import numpy as np
import jax
import jax.numpy as jnp
from jax import lax
from jax.experimental import pallas as pl
from jax.experimental.pallas import tpu as pltpu

LN_EPS = 1e-5  # nn.LayerNorm default


# ---------------------------------------------------------------------------
# Kernel 1: MultiheadAttention + residual + LayerNorm, gridded over batch only
# ---------------------------------------------------------------------------
def _mha_add_ln_kernel(*refs, num_head, scale, eps, mask_mode):
    if mask_mode == "dense":
        bias_ref, refs = refs[0], refs[1:]
    else:
        bias_ref = None
    (q_ref, kv_ref, wq_ref, bq_ref, wkv_ref, bkv_ref,
     wo_ref, bo_ref, gamma_ref, beta_ref, o_ref) = refs

    D = q_ref.shape[-1]
    hd = D // num_head

    q_in = q_ref[0]                              # (Sq, D) bf16
    kv_in = kv_ref[0]                            # (Sk, D) bf16
    q_res = q_in.astype(jnp.float32)             # residual branch in f32

    # Full-width projections (K = D contraction, N = D / 2D output).
    # Scale 1/sqrt(hd) applies to the full projected q (bias included), as in the ref.
    qp = (jnp.dot(q_in, wq_ref[...], preferred_element_type=jnp.float32)
          + bq_ref[...]) * scale                                               # (Sq, D) f32
    kvp = (jnp.dot(kv_in, wkv_ref[...], preferred_element_type=jnp.float32)
           + bkv_ref[...])                                                     # (Sk, 2D) f32

    qb = qp.astype(jnp.bfloat16)
    kb = kvp[:, :D].astype(jnp.bfloat16)
    vb = kvp[:, D:].astype(jnp.bfloat16)

    # Per-head attention (hd-wide matmuls are inherent to MHA); heads re-packed to (Sq, D)
    # so the output projection is a single full-width matmul.
    ctx_heads = []
    for h in range(num_head):
        sl = slice(h * hd, (h + 1) * hd)
        s = lax.dot_general(qb[:, sl], kb[:, sl],
                            (((1,), (1,)), ((), ())),
                            preferred_element_type=jnp.float32)                # (Sq, Sk) f32
        if mask_mode == "causal":
            row = lax.broadcasted_iota(jnp.int32, s.shape, 0)
            col = lax.broadcasted_iota(jnp.int32, s.shape, 1)
            s = jnp.where(col <= row, s, jnp.float32(-1e10))
        elif mask_mode == "dense":
            s = s + bias_ref[0]
        # Softmax in f32; divide -> EUP reciprocal (approx: rows sum to 1 +- ~1e-3).
        s = s - jnp.max(s, axis=-1, keepdims=True)
        p = jnp.exp(s)
        p = p * pl.reciprocal(jnp.sum(p, axis=-1, keepdims=True), approx=True)
        # TODO(synk): qk_dropout / qkv_dropout are training-mode only; identity at eval.
        ctx_heads.append(jnp.dot(p.astype(jnp.bfloat16), vb[:, sl],
                                 preferred_element_type=jnp.float32))          # (Sq, hd)
    ctx = jnp.concatenate(ctx_heads, axis=-1)                                  # (Sq, D) f32

    out = jnp.dot(ctx.astype(jnp.bfloat16), wo_ref[...],
                  preferred_element_type=jnp.float32) + bo_ref[...]            # (Sq, D) f32

    # Residual add + LayerNorm (f32 statistics).
    x = out + q_res
    mu = jnp.mean(x, axis=-1, keepdims=True)
    xc = x - mu
    var = jnp.mean(xc * xc, axis=-1, keepdims=True)
    y = xc * lax.rsqrt(var + eps)
    o_ref[0] = (y * gamma_ref[...] + beta_ref[...]).astype(o_ref.dtype)


def mha_add_layernorm(q, kv, params, ln_params, num_head, *, mask_mode="none",
                      bias=None, out_dtype=jnp.float32, eps=LN_EPS):
    B, Sq, D = q.shape
    Sk = kv.shape[1]
    H = num_head
    assert D % H == 0
    hd = D // H

    # Layout plumbing once in the wrapper: pre-transposed bf16 weights, fused K/V weight.
    wq = params["Wq"].T.astype(jnp.bfloat16)                                   # (D, D)
    bq = params["bq"].reshape(1, D).astype(jnp.float32)
    wkv = jnp.concatenate([params["Wk"].T, params["Wv"].T], axis=1).astype(jnp.bfloat16)  # (D, 2D)
    bkv = jnp.concatenate([params["bk"], params["bv"]]).reshape(1, 2 * D).astype(jnp.float32)
    wo = params["Wo"].T.astype(jnp.bfloat16)                                   # (D, D)
    bo = params["bo"].reshape(1, D).astype(jnp.float32)
    gamma = ln_params["gamma"].reshape(1, D).astype(jnp.float32)
    beta = ln_params["beta"].reshape(1, D).astype(jnp.float32)

    q_b = q.astype(jnp.bfloat16)
    kv_b = kv.astype(jnp.bfloat16)

    kernel = functools.partial(_mha_add_ln_kernel, num_head=H,
                               scale=1.0 / math.sqrt(hd), eps=eps, mask_mode=mask_mode)

    q_spec = pl.BlockSpec((1, Sq, D), lambda b: (b, 0, 0))
    kv_spec = pl.BlockSpec((1, Sk, D), lambda b: (b, 0, 0))
    mat_D = pl.BlockSpec((D, D), lambda b: (0, 0))
    mat_2D = pl.BlockSpec((D, 2 * D), lambda b: (0, 0))
    vec_D = pl.BlockSpec((1, D), lambda b: (0, 0))
    vec_2D = pl.BlockSpec((1, 2 * D), lambda b: (0, 0))
    out_spec = pl.BlockSpec((1, Sq, D), lambda b: (b, 0, 0))

    in_specs = [q_spec, kv_spec, mat_D, vec_D, mat_2D, vec_2D,
                mat_D, vec_D, vec_D, vec_D]
    args = [q_b, kv_b, wq, bq, wkv, bkv, wo, bo, gamma, beta]
    if mask_mode == "dense":
        in_specs = [pl.BlockSpec((1, Sq, Sk), lambda b: (b, 0, 0))] + in_specs
        args = [bias] + args

    return pl.pallas_call(
        kernel,
        out_shape=jax.ShapeDtypeStruct((B, Sq, D), out_dtype),
        grid_spec=pltpu.PrefetchScalarGridSpec(
            num_scalar_prefetch=0,
            grid=(B,),
            in_specs=in_specs,
            out_specs=out_spec),
        compiler_params=pltpu.CompilerParams(
            dimension_semantics=("parallel",)),
    )(*args)


# ---------------------------------------------------------------------------
# Kernel 2: FFN (Linear -> ReLU -> Linear) + residual + LayerNorm, row-tiled
# ---------------------------------------------------------------------------
def _ffn_add_ln_kernel(y_ref, w1_ref, b1_ref, w2_ref, b2_ref,
                       gamma_ref, beta_ref, o_ref, *, eps):
    y_in = y_ref[...]                            # (tm, D) bf16
    y_res = y_in.astype(jnp.float32)             # residual branch in f32
    hidden = jnp.dot(y_in, w1_ref[...], preferred_element_type=jnp.float32) + b1_ref[...]
    hidden = jnp.maximum(hidden, 0.0)            # ReLU in f32
    out = jnp.dot(hidden.astype(jnp.bfloat16), w2_ref[...],
                  preferred_element_type=jnp.float32) + b2_ref[...]
    x = out + y_res
    mu = jnp.mean(x, axis=-1, keepdims=True)
    xc = x - mu
    var = jnp.mean(xc * xc, axis=-1, keepdims=True)
    o_ref[...] = ((xc * lax.rsqrt(var + eps)) * gamma_ref[...]
                  + beta_ref[...]).astype(o_ref.dtype)


def ffn_add_layernorm(y, ffn_params, ln_params, eps=LN_EPS, out_dtype=jnp.float32):
    B, S, D = y.shape
    Dff = ffn_params["W1"].shape[0]
    M = B * S

    w1 = ffn_params["W1"].T.astype(jnp.bfloat16)         # (D, Dff) — pre-transposed
    b1 = ffn_params["b1"].reshape(1, Dff).astype(jnp.float32)
    w2 = ffn_params["W2"].T.astype(jnp.bfloat16)         # (Dff, D) — pre-transposed
    b2 = ffn_params["b2"].reshape(1, D).astype(jnp.float32)
    gamma = ln_params["gamma"].reshape(1, D).astype(jnp.float32)
    beta = ln_params["beta"].reshape(1, D).astype(jnp.float32)

    # Flatten (B,S) -> rows and row-tile so the MXU M-dim is fed with many rows per step.
    y_rows = y.reshape(M, D).astype(jnp.bfloat16)
    tm = M if M <= 256 else 256
    M_pad = pl.cdiv(M, tm) * tm
    if M_pad != M:
        y_rows = jnp.pad(y_rows, ((0, M_pad - M), (0, 0)))

    kernel = functools.partial(_ffn_add_ln_kernel, eps=eps)
    out = pl.pallas_call(
        kernel,
        out_shape=jax.ShapeDtypeStruct((M_pad, D), out_dtype),
        grid_spec=pltpu.PrefetchScalarGridSpec(
            num_scalar_prefetch=0,
            grid=(M_pad // tm,),
            in_specs=[pl.BlockSpec((tm, D), lambda i: (i, 0)),
                      pl.BlockSpec((D, Dff), lambda i: (0, 0)),
                      pl.BlockSpec((1, Dff), lambda i: (0, 0)),
                      pl.BlockSpec((Dff, D), lambda i: (0, 0)),
                      pl.BlockSpec((1, D), lambda i: (0, 0)),
                      pl.BlockSpec((1, D), lambda i: (0, 0)),
                      pl.BlockSpec((1, D), lambda i: (0, 0))],
            out_specs=pl.BlockSpec((tm, D), lambda i: (i, 0))),
        compiler_params=pltpu.CompilerParams(
            dimension_semantics=("parallel",)),
    )(y_rows, w1, b1, w2, b2, gamma, beta)
    return out[:M].reshape(B, S, D)


# ---------------------------------------------------------------------------
# Mask handling: None -> no bias; causal tril -> generated in-kernel; else dense bias
# ---------------------------------------------------------------------------
def _mask_to_mode(mask, B, Sq, Sk):
    if mask is None:
        return "none", None
    is_causal = False
    try:
        m = np.asarray(mask)
        if m.ndim == 2 and m.shape == (Sq, Sk):
            is_causal = bool(np.array_equal(m != 0, np.tril(np.ones((Sq, Sk), bool))))
    except Exception:   # abstract tracer etc. -> fall back to dense bias
        is_causal = False
    if is_causal:
        return "causal", None
    mb = jnp.broadcast_to(jnp.asarray(mask), (B, Sq, Sk))
    bias = jnp.where(mb == 0, jnp.float32(-1e10), jnp.float32(0.0))
    return "dense", bias


# ---------------------------------------------------------------------------
# Full DecoderLayer forward (matches the PyTorch module)
# ---------------------------------------------------------------------------
def decoder_layer(tg, encoded_input, src_mask, trg_mask, params, num_head=4):
    B, Sq, D = tg.shape
    Sk = encoded_input.shape[1]

    trg_mode, trg_bias = _mask_to_mode(trg_mask, B, Sq, Sq)
    src_mode, src_bias = _mask_to_mode(src_mask, B, Sq, Sk)

    # Intermediate activations stored in bf16 to halve inter-kernel HBM traffic.
    y = mha_add_layernorm(tg, tg, params["trg_attention"], params["norm1"], num_head,
                          mask_mode=trg_mode, bias=trg_bias, out_dtype=jnp.bfloat16)
    y = mha_add_layernorm(y, encoded_input, params["encoder_attention"], params["norm2"],
                          num_head, mask_mode=src_mode, bias=src_bias,
                          out_dtype=jnp.bfloat16)
    return ffn_add_layernorm(y, params["ffn"], params["norm3"], out_dtype=jnp.float32)


# ---------------------------------------------------------------------------
# Pure-JAX f32 reference
# ---------------------------------------------------------------------------
def _layernorm_ref(x, gamma, beta, eps=LN_EPS):
    mu = jnp.mean(x, axis=-1, keepdims=True)
    var = jnp.mean((x - mu) ** 2, axis=-1, keepdims=True)
    return (x - mu) / jnp.sqrt(var + eps) * gamma + beta


def _mha_ref(q, k, v, mask, p, num_head):
    B, Sq, D = q.shape
    Sk = k.shape[1]
    hd = D // num_head
    qp = q @ p["Wq"].T + p["bq"]
    kp = k @ p["Wk"].T + p["bk"]
    vp = v @ p["Wv"].T + p["bv"]
    qh = qp.reshape(B, Sq, num_head, hd).transpose(0, 2, 1, 3)
    kh = kp.reshape(B, Sk, num_head, hd).transpose(0, 2, 1, 3)
    vh = vp.reshape(B, Sk, num_head, hd).transpose(0, 2, 1, 3)
    att = jnp.einsum('bhqd,bhkd->bhqk', qh, kh) / math.sqrt(hd)
    if mask is not None:
        att = jnp.where(mask == 0, -1e10, att)
    att = jax.nn.softmax(att, axis=-1)
    ctx = jnp.einsum('bhqk,bhkd->bhqd', att, vh)
    ctx = ctx.transpose(0, 2, 1, 3).reshape(B, Sq, D)
    return ctx @ p["Wo"].T + p["bo"]


def _decoder_layer_ref(tg, enc, src_mask, trg_mask, params, num_head=4):
    p = params
    y = _layernorm_ref(_mha_ref(tg, tg, tg, trg_mask, p["trg_attention"], num_head) + tg,
                       p["norm1"]["gamma"], p["norm1"]["beta"])
    y = _layernorm_ref(_mha_ref(y, enc, enc, src_mask, p["encoder_attention"], num_head) + y,
                       p["norm2"]["gamma"], p["norm2"]["beta"])
    ff = jnp.maximum(y @ p["ffn"]["W1"].T + p["ffn"]["b1"], 0.0) @ p["ffn"]["W2"].T + p["ffn"]["b2"]
    return _layernorm_ref(ff + y, p["norm3"]["gamma"], p["norm3"]["beta"])


# ---------------------------------------------------------------------------
# Deterministic init (nn.Linear / nn.LayerNorm conventions)
# ---------------------------------------------------------------------------
def _init_linear(key, d_in, d_out):
    kw, kb = jax.random.split(key)
    bound = 1.0 / math.sqrt(d_in)
    W = jax.random.uniform(kw, (d_out, d_in), jnp.float32, -bound, bound)
    b = jax.random.uniform(kb, (d_out,), jnp.float32, -bound, bound)
    return W, b


def _init_mha_params(key, d_model):
    ks = jax.random.split(key, 4)
    Wq, bq = _init_linear(ks[0], d_model, d_model)
    Wk, bk = _init_linear(ks[1], d_model, d_model)
    Wv, bv = _init_linear(ks[2], d_model, d_model)
    Wo, bo = _init_linear(ks[3], d_model, d_model)
    return dict(Wq=Wq, bq=bq, Wk=Wk, bk=bk, Wv=Wv, bv=bv, Wo=Wo, bo=bo)


def _init_ln(key, d_model):
    kg, kb = jax.random.split(key)
    gamma = 1.0 + 0.1 * jax.random.normal(kg, (d_model,), jnp.float32)
    beta = 0.1 * jax.random.normal(kb, (d_model,), jnp.float32)
    return dict(gamma=gamma, beta=beta)


if __name__ == "__main__":
    B, S_TG, S_SRC, D, H, D_FF = 2, 8, 16, 128, 4, 1024

    key = jax.random.PRNGKey(0)
    k_in, k_enc, k_a1, k_a2, k_ffn, k_n1, k_n2, k_n3 = jax.random.split(key, 8)

    tg = jax.random.normal(k_in, (B, S_TG, D), jnp.float32)
    enc = jax.random.normal(k_enc, (B, S_SRC, D), jnp.float32)

    # Causal target mask (1 = keep, 0 = masked), no source mask.
    trg_mask = jnp.tril(jnp.ones((S_TG, S_TG), jnp.int32))
    src_mask = None

    kf1, kf2 = jax.random.split(k_ffn)
    W1, b1 = _init_linear(kf1, D, D_FF)
    W2, b2 = _init_linear(kf2, D_FF, D)

    params = dict(
        trg_attention=_init_mha_params(k_a1, D),
        encoder_attention=_init_mha_params(k_a2, D),
        ffn=dict(W1=W1, b1=b1, W2=W2, b2=b2),
        norm1=_init_ln(k_n1, D),
        norm2=_init_ln(k_n2, D),
        norm3=_init_ln(k_n3, D),
    )

    out = decoder_layer(tg, enc, src_mask, trg_mask, params, num_head=H)
    out = jax.block_until_ready(out)

    ref = _decoder_layer_ref(tg, enc, src_mask, trg_mask, params, num_head=H)
    assert out.shape == (B, S_TG, D)
    max_err = jnp.max(jnp.abs(out - ref))
    # bf16 MXU operands / bf16 inter-kernel activations / approx softmax reciprocal
    # (f32 accumulation, softmax and LayerNorm stats) -> loosened tolerance.
    assert jnp.allclose(out, ref, atol=7e-2, rtol=7e-2), \
        f"mismatch vs reference (max |err|={max_err})"

    print("KERNEL_OK")
</pallas_src>

<mosaic_0001>
module attributes {stable_mosaic.version = 11 : i64} {
  func.func @_mha_add_ln_kernel(%arg0: i32, %arg1: memref<1x8x128xbf16, #tpu.memory_space<vmem>>, %arg2: memref<1x8x128xbf16, #tpu.memory_space<vmem>>, %arg3: memref<128x128xbf16, #tpu.memory_space<vmem>>, %arg4: memref<1x128xf32, #tpu.memory_space<vmem>>, %arg5: memref<128x256xbf16, #tpu.memory_space<vmem>>, %arg6: memref<1x256xf32, #tpu.memory_space<vmem>>, %arg7: memref<128x128xbf16, #tpu.memory_space<vmem>>, %arg8: memref<1x128xf32, #tpu.memory_space<vmem>>, %arg9: memref<1x128xf32, #tpu.memory_space<vmem>>, %arg10: memref<1x128xf32, #tpu.memory_space<vmem>>, %arg11: memref<1x8x128xbf16, #tpu.memory_space<vmem>>) attributes {dimension_semantics = [#tpu.dimension_semantics<parallel>], iteration_bounds = array<i64: 2>, scalar_prefetch = 0 : i64, scratch_operands = 0 : i64, tpu.core_type = #tpu.core_type<tc>, window_params = [{transform_indices = @transform_0, window_bounds = array<i64: 1, 8, 128>}, {transform_indices = @transform_1, window_bounds = array<i64: 1, 8, 128>}, {pipeline_mode = #tpu.pipeline_mode<synchronous>, transform_indices = @transform_2, window_bounds = array<i64: 128, 128>}, {pipeline_mode = #tpu.pipeline_mode<synchronous>, transform_indices = @transform_3, window_bounds = array<i64: 1, 128>}, {pipeline_mode = #tpu.pipeline_mode<synchronous>, transform_indices = @transform_4, window_bounds = array<i64: 128, 256>}, {pipeline_mode = #tpu.pipeline_mode<synchronous>, transform_indices = @transform_5, window_bounds = array<i64: 1, 256>}, {pipeline_mode = #tpu.pipeline_mode<synchronous>, transform_indices = @transform_6, window_bounds = array<i64: 128, 128>}, {pipeline_mode = #tpu.pipeline_mode<synchronous>, transform_indices = @transform_7, window_bounds = array<i64: 1, 128>}, {pipeline_mode = #tpu.pipeline_mode<synchronous>, transform_indices = @transform_8, window_bounds = array<i64: 1, 128>}, {pipeline_mode = #tpu.pipeline_mode<synchronous>, transform_indices = @transform_9, window_bounds = array<i64: 1, 128>}, {transform_indices = @transform_10, window_bounds = array<i64: 1, 8, 128>}]} {
    %c0 = arith.constant 0 : index
    %c0_0 = arith.constant 0 : index
    %c0_1 = arith.constant 0 : index
    %0 = vector.load %arg1[%c0, %c0_0, %c0_1] : memref<1x8x128xbf16, #tpu.memory_space<vmem>>, vector<1x8x128xbf16>
    %1 = vector.shape_cast %0 : vector<1x8x128xbf16> to vector<8x128xbf16>
    %c0_2 = arith.constant 0 : index
    %c0_3 = arith.constant 0 : index
    %c0_4 = arith.constant 0 : index
    %2 = vector.load %arg2[%c0_2, %c0_3, %c0_4] : memref<1x8x128xbf16, #tpu.memory_space<vmem>>, vector<1x8x128xbf16>
    %3 = vector.shape_cast %2 : vector<1x8x128xbf16> to vector<8x128xbf16>
    %4 = arith.extf %1 : vector<8x128xbf16> to vector<8x128xf32>
    %c0_5 = arith.constant 0 : index
    %c0_6 = arith.constant 0 : index
    %5 = vector.load %arg3[%c0_5, %c0_6] : memref<128x128xbf16, #tpu.memory_space<vmem>>, vector<128x128xbf16>
    %cst = arith.constant dense<0.000000e+00> : vector<8x128xf32>
    %6 = tpu.matmul %1, %5, %cst {dimension_numbers = #tpu.dot_dimension_numbers<[1], [0], [0], [1], [0, 0, 1, 1], [], []>} : vector<8x128xbf16>, vector<128x128xbf16>, vector<8x128xf32> -> vector<8x128xf32>
    %c0_7 = arith.constant 0 : index
    %c0_8 = arith.constant 0 : index
    %7 = vector.load %arg4[%c0_7, %c0_8] : memref<1x128xf32, #tpu.memory_space<vmem>>, vector<1x128xf32>
    %8 = vector.broadcast %7 : vector<1x128xf32> to vector<8x128xf32>
    %9 = arith.addf %6, %8 : vector<8x128xf32>
    %cst_9 = arith.constant 0.176776692 : f32
    %10 = vector.broadcast %cst_9 : f32 to vector<8x128xf32>
    %11 = arith.mulf %9, %10 : vector<8x128xf32>
    %c0_10 = arith.constant 0 : index
    %c0_11 = arith.constant 0 : index
    %12 = vector.load %arg5[%c0_10, %c0_11] : memref<128x256xbf16, #tpu.memory_space<vmem>>, vector<128x256xbf16>
    %cst_12 = arith.constant dense<0.000000e+00> : vector<8x256xf32>
    %13 = tpu.matmul %3, %12, %cst_12 {dimension_numbers = #tpu.dot_dimension_numbers<[1], [0], [0], [1], [0, 0, 1, 1], [], []>} : vector<8x128xbf16>, vector<128x256xbf16>, vector<8x256xf32> -> vector<8x256xf32>
    %c0_13 = arith.constant 0 : index
    %c0_14 = arith.constant 0 : index
    %14 = vector.load %arg6[%c0_13, %c0_14] : memref<1x256xf32, #tpu.memory_space<vmem>>, vector<1x256xf32>
    %15 = vector.broadcast %14 : vector<1x256xf32> to vector<8x256xf32>
    %16 = arith.addf %13, %15 : vector<8x256xf32>
    %17 = arith.truncf %11 : vector<8x128xf32> to vector<8x128xbf16>
    %18 = vector.extract_strided_slice %16 {offsets = [0, 0], sizes = [8, 128], strides = [1, 1]} : vector<8x256xf32> to vector<8x128xf32>
    %19 = arith.truncf %18 : vector<8x128xf32> to vector<8x128xbf16>
    %20 = vector.extract_strided_slice %16 {offsets = [0, 128], sizes = [8, 128], strides = [1, 1]} : vector<8x256xf32> to vector<8x128xf32>
    %21 = arith.truncf %20 : vector<8x128xf32> to vector<8x128xbf16>
    %22 = vector.extract_strided_slice %17 {offsets = [0, 0], sizes = [8, 32], strides = [1, 1]} : vector<8x128xbf16> to vector<8x32xbf16>
    %23 = vector.extract_strided_slice %19 {offsets = [0, 0], sizes = [8, 32], strides = [1, 1]} : vector<8x128xbf16> to vector<8x32xbf16>
    %cst_15 = arith.constant dense<0.000000e+00> : vector<8x8xf32>
    %24 = tpu.matmul %22, %23, %cst_15 {dimension_numbers = #tpu.dot_dimension_numbers<[1], [1], [0], [0], [0, 0, 1, 0], [], []>} : vector<8x32xbf16>, vector<8x32xbf16>, vector<8x8xf32> -> vector<8x8xf32>
    %25 = tpu.iota {dimensions = array<i32: 0>} : vector<8x8xi32>
    %26 = tpu.iota {dimensions = array<i32: 1>} : vector<8x8xi32>
    %27 = arith.cmpi sle, %26, %25 : vector<8x8xi32>
    %cst_16 = arith.constant -1.000000e+10 : f32
    %28 = vector.broadcast %cst_16 : f32 to vector<8x8xf32>
    %29 = arith.select %27, %24, %28 : vector<8x8xi1>, vector<8x8xf32>
    %cst_17 = arith.constant dense<0xFF800000> : vector<8xf32>
    %30 = vector.multi_reduction <maximumf>, %29, %cst_17 [1] : vector<8x8xf32> to vector<8xf32>
    %31 = vector.shape_cast %30 : vector<8xf32> to vector<8x1xf32>
    %32 = vector.broadcast %31 : vector<8x1xf32> to vector<8x8xf32>
    %33 = arith.subf %29, %32 : vector<8x8xf32>
    %34 = math.exp %33 : vector<8x8xf32>
    %cst_18 = arith.constant dense<0.000000e+00> : vector<8xf32>
    %35 = vector.multi_reduction <add>, %34, %cst_18 [1] : vector<8x8xf32> to vector<8xf32>
    %36 = vector.shape_cast %35 : vector<8xf32> to vector<8x1xf32>
    %37 = tpu.reciprocal %36 {approx = true} : vector<8x1xf32> -> vector<8x1xf32>
    %38 = vector.broadcast %37 : vector<8x1xf32> to vector<8x8xf32>
    %39 = arith.mulf %34, %38 : vector<8x8xf32>
    %40 = arith.truncf %39 : vector<8x8xf32> to vector<8x8xbf16>
    %41 = vector.extract_strided_slice %21 {offsets = [0, 0], sizes = [8, 32], strides = [1, 1]} : vector<8x128xbf16> to vector<8x32xbf16>
    %cst_19 = arith.constant dense<0.000000e+00> : vector<8x32xf32>
    %42 = tpu.matmul %40, %41, %cst_19 {dimension_numbers = #tpu.dot_dimension_numbers<[1], [0], [0], [1], [0, 0, 1, 1], [], []>} : vector<8x8xbf16>, vector<8x32xbf16>, vector<8x32xf32> -> vector<8x32xf32>
    %43 = vector.extract_strided_slice %17 {offsets = [0, 32], sizes = [8, 32], strides = [1, 1]} : vector<8x128xbf16> to vector<8x32xbf16>
    %44 = vector.extract_strided_slice %19 {offsets = [0, 32], sizes = [8, 32], strides = [1, 1]} : vector<8x128xbf16> to vector<8x32xbf16>
    %cst_20 = arith.constant dense<0.000000e+00> : vector<8x8xf32>
    %45 = tpu.matmul %43, %44, %cst_20 {dimension_numbers = #tpu.dot_dimension_numbers<[1], [1], [0], [0], [0, 0, 1, 0], [], []>} : vector<8x32xbf16>, vector<8x32xbf16>, vector<8x8xf32> -> vector<8x8xf32>
    %46 = tpu.iota {dimensions = array<i32: 0>} : vector<8x8xi32>
    %47 = tpu.iota {dimensions = array<i32: 1>} : vector<8x8xi32>
    %48 = arith.cmpi sle, %47, %46 : vector<8x8xi32>
    %cst_21 = arith.constant -1.000000e+10 : f32
    %49 = vector.broadcast %cst_21 : f32 to vector<8x8xf32>
    %50 = arith.select %48, %45, %49 : vector<8x8xi1>, vector<8x8xf32>
    %cst_22 = arith.constant dense<0xFF800000> : vector<8xf32>
    %51 = vector.multi_reduction <maximumf>, %50, %cst_22 [1] : vector<8x8xf32> to vector<8xf32>
    %52 = vector.shape_cast %51 : vector<8xf32> to vector<8x1xf32>
    %53 = vector.broadcast %52 : vector<8x1xf32> to vector<8x8xf32>
    %54 = arith.subf %50, %53 : vector<8x8xf32>
    %55 = math.exp %54 : vector<8x8xf32>
    %cst_23 = arith.constant dense<0.000000e+00> : vector<8xf32>
    %56 = vector.multi_reduction <add>, %55, %cst_23 [1] : vector<8x8xf32> to vector<8xf32>
    %57 = vector.shape_cast %56 : vector<8xf32> to vector<8x1xf32>
    %58 = tpu.reciprocal %57 {approx = true} : vector<8x1xf32> -> vector<8x1xf32>
    %59 = vector.broadcast %58 : vector<8x1xf32> to vector<8x8xf32>
    %60 = arith.mulf %55, %59 : vector<8x8xf32>
    %61 = arith.truncf %60 : vector<8x8xf32> to vector<8x8xbf16>
    %62 = vector.extract_strided_slice %21 {offsets = [0, 32], sizes = [8, 32], strides = [1, 1]} : vector<8x128xbf16> to vector<8x32xbf16>
    %cst_24 = arith.constant dense<0.000000e+00> : vector<8x32xf32>
    %63 = tpu.matmul %61, %62, %cst_24 {dimension_numbers = #tpu.dot_dimension_numbers<[1], [0], [0], [1], [0, 0, 1, 1], [], []>} : vector<8x8xbf16>, vector<8x32xbf16>, vector<8x32xf32> -> vector<8x32xf32>
    %64 = vector.extract_strided_slice %17 {offsets = [0, 64], sizes = [8, 32], strides = [1, 1]} : vector<8x128xbf16> to vector<8x32xbf16>
    %65 = vector.extract_strided_slice %19 {offsets = [0, 64], sizes = [8, 32], strides = [1, 1]} : vector<8x128xbf16> to vector<8x32xbf16>
    %cst_25 = arith.constant dense<0.000000e+00> : vector<8x8xf32>
    %66 = tpu.matmul %64, %65, %cst_25 {dimension_numbers = #tpu.dot_dimension_numbers<[1], [1], [0], [0], [0, 0, 1, 0], [], []>} : vector<8x32xbf16>, vector<8x32xbf16>, vector<8x8xf32> -> vector<8x8xf32>
    %67 = tpu.iota {dimensions = array<i32: 0>} : vector<8x8xi32>
    %68 = tpu.iota {dimensions = array<i32: 1>} : vector<8x8xi32>
    %69 = arith.cmpi sle, %68, %67 : vector<8x8xi32>
    %cst_26 = arith.constant -1.000000e+10 : f32
    %70 = vector.broadcast %cst_26 : f32 to vector<8x8xf32>
    %71 = arith.select %69, %66, %70 : vector<8x8xi1>, vector<8x8xf32>
    %cst_27 = arith.constant dense<0xFF800000> : vector<8xf32>
    %72 = vector.multi_reduction <maximumf>, %71, %cst_27 [1] : vector<8x8xf32> to vector<8xf32>
    %73 = vector.shape_cast %72 : vector<8xf32> to vector<8x1xf32>
    %74 = vector.broadcast %73 : vector<8x1xf32> to vector<8x8xf32>
    %75 = arith.subf %71, %74 : vector<8x8xf32>
    %76 = math.exp %75 : vector<8x8xf32>
    %cst_28 = arith.constant dense<0.000000e+00> : vector<8xf32>
    %77 = vector.multi_reduction <add>, %76, %cst_28 [1] : vector<8x8xf32> to vector<8xf32>
    %78 = vector.shape_cast %77 : vector<8xf32> to vector<8x1xf32>
    %79 = tpu.reciprocal %78 {approx = true} : vector<8x1xf32> -> vector<8x1xf32>
    %80 = vector.broadcast %79 : vector<8x1xf32> to vector<8x8xf32>
    %81 = arith.mulf %76, %80 : vector<8x8xf32>
    %82 = arith.truncf %81 : vector<8x8xf32> to vector<8x8xbf16>
    %83 = vector.extract_strided_slice %21 {offsets = [0, 64], sizes = [8, 32], strides = [1, 1]} : vector<8x128xbf16> to vector<8x32xbf16>
    %cst_29 = arith.constant dense<0.000000e+00> : vector<8x32xf32>
    %84 = tpu.matmul %82, %83, %cst_29 {dimension_numbers = #tpu.dot_dimension_numbers<[1], [0], [0], [1], [0, 0, 1, 1], [], []>} : vector<8x8xbf16>, vector<8x32xbf16>, vector<8x32xf32> -> vector<8x32xf32>
    %85 = vector.extract_strided_slice %17 {offsets = [0, 96], sizes = [8, 32], strides = [1, 1]} : vector<8x128xbf16> to vector<8x32xbf16>
    %86 = vector.extract_strided_slice %19 {offsets = [0, 96], sizes = [8, 32], strides = [1, 1]} : vector<8x128xbf16> to vector<8x32xbf16>
    %cst_30 = arith.constant dense<0.000000e+00> : vector<8x8xf32>
    %87 = tpu.matmul %85, %86, %cst_30 {dimension_numbers = #tpu.dot_dimension_numbers<[1], [1], [0], [0], [0, 0, 1, 0], [], []>} : vector<8x32xbf16>, vector<8x32xbf16>, vector<8x8xf32> -> vector<8x8xf32>
    %88 = tpu.iota {dimensions = array<i32: 0>} : vector<8x8xi32>
    %89 = tpu.iota {dimensions = array<i32: 1>} : vector<8x8xi32>
    %90 = arith.cmpi sle, %89, %88 : vector<8x8xi32>
    %cst_31 = arith.constant -1.000000e+10 : f32
    %91 = vector.broadcast %cst_31 : f32 to vector<8x8xf32>
    %92 = arith.select %90, %87, %91 : vector<8x8xi1>, vector<8x8xf32>
    %cst_32 = arith.constant dense<0xFF800000> : vector<8xf32>
    %93 = vector.multi_reduction <maximumf>, %92, %cst_32 [1] : vector<8x8xf32> to vector<8xf32>
    %94 = vector.shape_cast %93 : vector<8xf32> to vector<8x1xf32>
    %95 = vector.broadcast %94 : vector<8x1xf32> to vector<8x8xf32>
    %96 = arith.subf %92, %95 : vector<8x8xf32>
    %97 = math.exp %96 : vector<8x8xf32>
    %cst_33 = arith.constant dense<0.000000e+00> : vector<8xf32>
    %98 = vector.multi_reduction <add>, %97, %cst_33 [1] : vector<8x8xf32> to vector<8xf32>
    %99 = vector.shape_cast %98 : vector<8xf32> to vector<8x1xf32>
    %100 = tpu.reciprocal %99 {approx = true} : vector<8x1xf32> -> vector<8x1xf32>
    %101 = vector.broadcast %100 : vector<8x1xf32> to vector<8x8xf32>
    %102 = arith.mulf %97, %101 : vector<8x8xf32>
    %103 = arith.truncf %102 : vector<8x8xf32> to vector<8x8xbf16>
    %104 = vector.extract_strided_slice %21 {offsets = [0, 96], sizes = [8, 32], strides = [1, 1]} : vector<8x128xbf16> to vector<8x32xbf16>
    %cst_34 = arith.constant dense<0.000000e+00> : vector<8x32xf32>
    %105 = tpu.matmul %103, %104, %cst_34 {dimension_numbers = #tpu.dot_dimension_numbers<[1], [0], [0], [1], [0, 0, 1, 1], [], []>} : vector<8x8xbf16>, vector<8x32xbf16>, vector<8x32xf32> -> vector<8x32xf32>
    %106 = tpu.concatenate %42, %63, %84, %105 in 1 : vector<8x32xf32>, vector<8x32xf32>, vector<8x32xf32>, vector<8x32xf32> -> vector<8x128xf32>
    %107 = arith.truncf %106 : vector<8x128xf32> to vector<8x128xbf16>
    %c0_35 = arith.constant 0 : index
    %c0_36 = arith.constant 0 : index
    %108 = vector.load %arg7[%c0_35, %c0_36] : memref<128x128xbf16, #tpu.memory_space<vmem>>, vector<128x128xbf16>
    %cst_37 = arith.constant dense<0.000000e+00> : vector<8x128xf32>
    %109 = tpu.matmul %107, %108, %cst_37 {dimension_numbers = #tpu.dot_dimension_numbers<[1], [0], [0], [1], [0, 0, 1, 1], [], []>} : vector<8x128xbf16>, vector<128x128xbf16>, vector<8x128xf32> -> vector<8x128xf32>
    %c0_38 = arith.constant 0 : index
    %c0_39 = arith.constant 0 : index
    %110 = vector.load %arg8[%c0_38, %c0_39] : memref<1x128xf32, #tpu.memory_space<vmem>>, vector<1x128xf32>
    %111 = vector.broadcast %110 : vector<1x128xf32> to vector<8x128xf32>
    %112 = arith.addf %109, %111 : vector<8x128xf32>
    %113 = arith.addf %112, %4 : vector<8x128xf32>
    %cst_40 = arith.constant dense<0.000000e+00> : vector<8xf32>
    %114 = vector.multi_reduction <add>, %113, %cst_40 [1] : vector<8x128xf32> to vector<8xf32>
    %115 = vector.shape_cast %114 : vector<8xf32> to vector<8x1xf32>
    %cst_41 = arith.constant 1.280000e+02 : f32
    %116 = vector.broadcast %cst_41 : f32 to vector<8x1xf32>
    %117 = arith.divf %115, %116 : vector<8x1xf32>
    %118 = vector.broadcast %117 : vector<8x1xf32> to vector<8x128xf32>
    %119 = arith.subf %113, %118 : vector<8x128xf32>
    %120 = arith.mulf %119, %119 : vector<8x128xf32>
    %cst_42 = arith.constant dense<0.000000e+00> : vector<8xf32>
    %121 = vector.multi_reduction <add>, %120, %cst_42 [1] : vector<8x128xf32> to vector<8xf32>
    %122 = vector.shape_cast %121 : vector<8xf32> to vector<8x1xf32>
    %cst_43 = arith.constant 1.280000e+02 : f32
    %123 = vector.broadcast %cst_43 : f32 to vector<8x1xf32>
    %124 = arith.divf %122, %123 : vector<8x1xf32>
    %cst_44 = arith.constant 9.99999974E-6 : f32
    %125 = vector.broadcast %cst_44 : f32 to vector<8x1xf32>
    %126 = arith.addf %124, %125 : vector<8x1xf32>
    %127 = math.rsqrt %126 : vector<8x1xf32>
    %128 = vector.broadcast %127 : vector<8x1xf32> to vector<8x128xf32>
    %129 = arith.mulf %119, %128 : vector<8x128xf32>
    %c0_45 = arith.constant 0 : index
    %c0_46 = arith.constant 0 : index
    %130 = vector.load %arg9[%c0_45, %c0_46] : memref<1x128xf32, #tpu.memory_space<vmem>>, vector<1x128xf32>
    %131 = vector.broadcast %130 : vector<1x128xf32> to vector<8x128xf32>
    %132 = arith.mulf %129, %131 : vector<8x128xf32>
    %c0_47 = arith.constant 0 : index
    %c0_48 = arith.constant 0 : index
    %133 = vector.load %arg10[%c0_47, %c0_48] : memref<1x128xf32, #tpu.memory_space<vmem>>, vector<1x128xf32>
    %134 = vector.broadcast %133 : vector<1x128xf32> to vector<8x128xf32>
    %135 = arith.addf %132, %134 : vector<8x128xf32>
    %136 = arith.truncf %135 : vector<8x128xf32> to vector<8x128xbf16>
    %c0_49 = arith.constant 0 : index
    %c0_50 = arith.constant 0 : index
    %c0_51 = arith.constant 0 : index
    %137 = vector.load %arg11[%c0_49, %c0_50, %c0_51] : memref<1x8x128xbf16, #tpu.memory_space<vmem>>, vector<1x8x128xbf16>
    %138 = vector.shape_cast %137 : vector<1x8x128xbf16> to vector<8x128xbf16>
    %139 = vector.shape_cast %136 : vector<8x128xbf16> to vector<1x8x128xbf16>
    tpu.vector_store %arg11[%c0_49, %c0_50, %c0_51], %139 {strides = array<i32>} : memref<1x8x128xbf16, #tpu.memory_space<vmem>>, vector<1x8x128xbf16>,
    return
  }
  func.func @transform_0(%arg0: i32) -> (i32, i32, i32) {
    %c0_i32 = arith.constant 0 : i32
    %c0_i32_0 = arith.constant 0 : i32
    %c0_i32_1 = arith.constant 0 : i32
    return %arg0, %c0_i32, %c0_i32_0 : i32, i32, i32
  }
  func.func @transform_1(%arg0: i32) -> (i32, i32, i32) {
    %c0_i32 = arith.constant 0 : i32
    %c0_i32_0 = arith.constant 0 : i32
    %c0_i32_1 = arith.constant 0 : i32
    return %arg0, %c0_i32, %c0_i32_0 : i32, i32, i32
  }
  func.func @transform_2(%arg0: i32) -> (i32, i32) {
    %c0_i32 = arith.constant 0 : i32
    %c0_i32_0 = arith.constant 0 : i32
    %c0_i32_1 = arith.constant 0 : i32
    return %c0_i32, %c0_i32_0 : i32, i32
  }
  func.func @transform_3(%arg0: i32) -> (i32, i32) {
    %c0_i32 = arith.constant 0 : i32
    %c0_i32_0 = arith.constant 0 : i32
    %c0_i32_1 = arith.constant 0 : i32
    return %c0_i32, %c0_i32_0 : i32, i32
  }
  func.func @transform_4(%arg0: i32) -> (i32, i32) {
    %c0_i32 = arith.constant 0 : i32
    %c0_i32_0 = arith.constant 0 : i32
    %c0_i32_1 = arith.constant 0 : i32
    return %c0_i32, %c0_i32_0 : i32, i32
  }
  func.func @transform_5(%arg0: i32) -> (i32, i32) {
    %c0_i32 = arith.constant 0 : i32
    %c0_i32_0 = arith.constant 0 : i32
    %c0_i32_1 = arith.constant 0 : i32
    return %c0_i32, %c0_i32_0 : i32, i32
  }
  func.func @transform_6(%arg0: i32) -> (i32, i32) {
    %c0_i32 = arith.constant 0 : i32
    %c0_i32_0 = arith.constant 0 : i32
    %c0_i32_1 = arith.constant 0 : i32
    return %c0_i32, %c0_i32_0 : i32, i32
  }
  func.func @transform_7(%arg0: i32) -> (i32, i32) {
    %c0_i32 = arith.constant 0 : i32
    %c0_i32_0 = arith.constant 0 : i32
    %c0_i32_1 = arith.constant 0 : i32
    return %c0_i32, %c0_i32_0 : i32, i32
  }
  func.func @transform_8(%arg0: i32) -> (i32, i32) {
    %c0_i32 = arith.constant 0 : i32
    %c0_i32_0 = arith.constant 0 : i32
    %c0_i32_1 = arith.constant 0 : i32
    return %c0_i32, %c0_i32_0 : i32, i32
  }
  func.func @transform_9(%arg0: i32) -> (i32, i32) {
    %c0_i32 = arith.constant 0 : i32
    %c0_i32_0 = arith.constant 0 : i32
    %c0_i32_1 = arith.constant 0 : i32
    return %c0_i32, %c0_i32_0 : i32, i32
  }
  func.func @transform_10(%arg0: i32) -> (i32, i32, i32) {
    %c0_i32 = arith.constant 0 : i32
    %c0_i32_0 = arith.constant 0 : i32
    %c0_i32_1 = arith.constant 0 : i32
    return %arg0, %c0_i32, %c0_i32_0 : i32, i32, i32
  }
}

</mosaic_0001>

<llo_original>
// kernel: tpu_custom_call.1
$region0: #{tpu_custom_call.1}
  #allocation0 [shape = 'u32[]', space=smem, size = 0x4, offset = 0x4, fixed_abs, tag = 'smem constant byte address 0x4 - core index']
  #allocation1 [shape = 'u32[144,128]{1,0:T(1,128)}', space=vmem, size = 0x12000, scoped, tag = 'internal scratch']
  %s0 = inlined_call_operand.hbm [shape: bf16[2,8,128], index: 0, kind: input, shape index: {}]
  %s1 = inlined_call_operand.hbm [shape: bf16[2,8,128], index: 1, kind: input, shape index: {}]
  %s2 = inlined_call_operand.hbm [shape: bf16[128,128], index: 2, kind: input, shape index: {}]
  %s3 = inlined_call_operand.vmem [shape: f32[1,128], index: 3, kind: input, shape index: {}]
  %s4 = inlined_call_operand.hbm [shape: bf16[128,256], index: 4, kind: input, shape index: {}]
  %s5 = inlined_call_operand.vmem [shape: f32[1,256], index: 5, kind: input, shape index: {}]
  %s6 = inlined_call_operand.hbm [shape: bf16[128,128], index: 6, kind: input, shape index: {}]
  %s7 = inlined_call_operand.vmem [shape: f32[1,128], index: 7, kind: input, shape index: {}]
  %s8 = inlined_call_operand.vmem [shape: f32[1,128], index: 8, kind: input, shape index: {}]
  %s9 = inlined_call_operand.vmem [shape: f32[1,128], index: 9, kind: input, shape index: {}]
  %s10 = inlined_call_operand.hbm [shape: bf16[2,8,128], index: 10, kind: output, shape index: {}]
  %s11 = sld [smem:[#allocation0]]
  $region93: #{tpu_custom_call.1} parent=0
    _
  %s13 = ssub.s32 1, %s11
  %s14 = scalar_select 0, %s13, %s11
  $region1: #{tpu_custom_call.1} parent=0
    #allocation2 [shape = 'u8[4096]{0}', space=vmem, size = 0x1000, scoped, tag = 'input window, operand 0']
    #allocation3 [shape = 's32[2]{0}', space=sflag, size = 0x8, scoped, tag = 'scoped memory for tpu_custom_call.1']
    #allocation4 [shape = 's32[2]{0}', space=sflag, size = 0x8, scoped, tag = 'scoped memory for tpu_custom_call.1']
    #allocation5 [shape = 'u8[4096]{0}', space=vmem, size = 0x1000, scoped, tag = 'input window, operand 1']
    #allocation6 [shape = 's32[2]{0}', space=sflag, size = 0x8, scoped, tag = 'scoped memory for tpu_custom_call.1']
    #allocation7 [shape = 'u8[32768]{0}', space=vmem, size = 0x8000, scoped, tag = 'input window, operand 2, single buffered']
    #allocation8 [shape = 'u8[65536]{0}', space=vmem, size = 0x10000, scoped, tag = 'input window, operand 4, single buffered']
    #allocation9 [shape = 's32[1]{0}', space=sflag, size = 0x4, scoped, tag = 'scoped memory for tpu_custom_call.1']
    #allocation10 [shape = 'u8[32768]{0}', space=vmem, size = 0x8000, scoped, tag = 'input window, operand 6, single buffered']
    #allocation11 [shape = 'u8[4096]{0}', space=vmem, size = 0x1000, scoped, tag = 'output window, operand 0']
    %15 = vsyncpa [#allocation3], 0
    %s16 = scalar_lea.sflag [#allocation3], 1
    %17 = vsyncpa %s16, 0
    %18 = vsyncpa [#allocation6], 0
    %s19 = scalar_lea.sflag [#allocation6], 1
    %20 = vsyncpa %s19, 0
    %21 = vsyncpa [#allocation9], 0
    %22 = vsyncpa [#allocation4], 0
    %s23 = scalar_lea.sflag [#allocation4], 1
    %24 = vsyncpa %s23, 0
    loop: start=0, step=1, limit=4
    $region2: #{tpu_custom_call.1} parent=1 // loop_pre_header
      _
    $region3: #{tpu_custom_call.1} parent=1 // loop_header
      %s26 = sphi 0, %s30
      %p27 = scmp.ge.s32.totalorder %s26, 4
      %s36 = sphi 0, %s38
      %s39 = sphi 0, %s36
      %s40 = sphi 0, %s39
      %s56 = sphi 0, %s40
      %s62 = sphi 0, %s64
      %s65 = sphi 0, %s62
      %s66 = sphi 0, %s65
      %s82 = sphi 0, %s66
      %s86 = sphi 0, %s86
      %s88 = sphi 0, %s86
      %s89 = sphi 0, %s88
      %s103 = sphi 0, %s89
      %s107 = sphi 0, %s107
      %s109 = sphi 0, %s107
      %s110 = sphi 0, %s109
      %s124 = sphi 0, %s110
      %s128 = sphi 0, %s128
      %s130 = sphi 0, %s128
      %s131 = sphi 0, %s130
      %s145 = sphi 0, %s131
      %s149 = sphi 0, %s149
      %s151 = sphi 0, %s149
      %s152 = sphi 0, %s151
      %s166 = sphi 0, %s152
      %s170 = sphi 0, %s170
      %s172 = sphi 0, %s170
      %s173 = sphi 0, %s172
      %s187 = sphi 0, %s173
      %s191 = sphi 0, %s191
      %s193 = sphi 0, %s191
      %s194 = sphi 0, %s193
      %s208 = sphi 0, %s194
      %s212 = sphi 0, %s212
      %s214 = sphi 0, %s212
      %s215 = sphi 0, %s214
      %s229 = sphi 0, %s215
      %s233 = sphi 0, %s233
      %s235 = sphi 0, %s233
      %s236 = sphi 0, %s235
      %s250 = sphi 0, %s236
      %s256 = sphi 0, %s258
      %s259 = sphi 0, %s256
      %s260 = sphi 0, %s259
      %s276 = sphi 0, %s260
    $region4: #{tpu_custom_call.1} parent=1 // loop_header_branch
      %29 = sbr.rel (%p27) target = $region8
    $region5: #{tpu_custom_call.1} parent=1 // loop_body
      %s31 = ssub.s32 %s26, 1
      %s32 = ssub.s32 %s26, 2
      %s33 = sadd.s32 %s26, 1
      %s34 = ssub.s32 %s26, %s33
      %p35 = scmp.eq.s32.totalorder %s34, 0
      %s37 = sadd.s32 %s36, 1
      %s38 = scalar_select %p35, %s36, %s37
      %p41 = pneg %p35
      %p42 = scmp.eq.s32.totalorder %s26, 1
      %p43 = por %p41, %p42
      %p44 = scmp.ne.s32.totalorder %s36, %s39
      %p45 = scmp.eq.s32.totalorder %s26, 0
      %p46 = por %p44, %p45
      %p47 = scmp.ne.s32.totalorder %s36, %s39
      %p48 = scmp.eq.s32.totalorder %s31, 1
      %p49 = por %p47, %p48
      %p50 = scmp.ne.s32.totalorder %s39, %s40
      %p51 = scmp.eq.s32.totalorder %s31, 0
      %p52 = por %p50, %p51
      %p53 = scmp.ne.s32.totalorder %s39, %s40
      %p54 = scmp.eq.s32.totalorder %s32, 1
      %p55 = por %p53, %p54
      %p57 = scmp.ne.s32.totalorder %s40, %s56
      %p58 = scmp.eq.s32.totalorder %s32, 0
      %p59 = por %p57, %p58
      %s60 = ssub.s32 %s26, %s33
      %p61 = scmp.eq.s32.totalorder %s60, 0
      %s63 = sadd.s32 %s62, 1
      %s64 = scalar_select %p61, %s62, %s63
      %p67 = pneg %p61
      %p68 = scmp.eq.s32.totalorder %s26, 1
      %p69 = por %p67, %p68
      %p70 = scmp.ne.s32.totalorder %s62, %s65
      %p71 = scmp.eq.s32.totalorder %s26, 0
      %p72 = por %p70, %p71
      %p73 = scmp.ne.s32.totalorder %s62, %s65
      %p74 = scmp.eq.s32.totalorder %s31, 1
      %p75 = por %p73, %p74
      %p76 = scmp.ne.s32.totalorder %s65, %s66
      %p77 = scmp.eq.s32.totalorder %s31, 0
      %p78 = por %p76, %p77
      %p79 = scmp.ne.s32.totalorder %s65, %s66
      %p80 = scmp.eq.s32.totalorder %s32, 1
      %p81 = por %p79, %p80
      %p83 = scmp.ne.s32.totalorder %s66, %s82
      %p84 = scmp.eq.s32.totalorder %s32, 0
      %p85 = por %p83, %p84
      %s87 = sadd.s32 %s86, 1
      %p90 = scmp.eq.s32.totalorder %s26, 1
      %p91 = scmp.ne.s32.totalorder %s86, %s88
      %p92 = scmp.eq.s32.totalorder %s26, 0
      %p93 = por %p91, %p92
      %p94 = scmp.ne.s32.totalorder %s86, %s88
      %p95 = scmp.eq.s32.totalorder %s31, 1
      %p96 = por %p94, %p95
      %p97 = scmp.ne.s32.totalorder %s88, %s89
      %p98 = scmp.eq.s32.totalorder %s31, 0
      %p99 = por %p97, %p98
      %p100 = scmp.ne.s32.totalorder %s88, %s89
      %p101 = scmp.eq.s32.totalorder %s32, 1
      %p102 = por %p100, %p101
      %p104 = scmp.ne.s32.totalorder %s89, %s103
      %p105 = scmp.eq.s32.totalorder %s32, 0
      %p106 = por %p104, %p105
      %s108 = sadd.s32 %s107, 1
      %p111 = scmp.eq.s32.totalorder %s26, 1
      %p112 = scmp.ne.s32.totalorder %s107, %s109
      %p113 = scmp.eq.s32.totalorder %s26, 0
      %p114 = por %p112, %p113
      %p115 = scmp.ne.s32.totalorder %s107, %s109
      %p116 = scmp.eq.s32.totalorder %s31, 1
      %p117 = por %p115, %p116
      %p118 = scmp.ne.s32.totalorder %s109, %s110
      %p119 = scmp.eq.s32.totalorder %s31, 0
      %p120 = por %p118, %p119
      %p121 = scmp.ne.s32.totalorder %s109, %s110
      %p122 = scmp.eq.s32.totalorder %s32, 1
      %p123 = por %p121, %p122
      %p125 = scmp.ne.s32.totalorder %s110, %s124
      %p126 = scmp.eq.s32.totalorder %s32, 0
      %p127 = por %p125, %p126
      %s129 = sadd.s32 %s128, 1
      %p132 = scmp.eq.s32.totalorder %s26, 1
      %p133 = scmp.ne.s32.totalorder %s128, %s130
      %p134 = scmp.eq.s32.totalorder %s26, 0
      %p135 = por %p133, %p134
      %p136 = scmp.ne.s32.totalorder %s128, %s130
      %p137 = scmp.eq.s32.totalorder %s31, 1
      %p138 = por %p136, %p137
      %p139 = scmp.ne.s32.totalorder %s130, %s131
      %p140 = scmp.eq.s32.totalorder %s31, 0
      %p141 = por %p139, %p140
      %p142 = scmp.ne.s32.totalorder %s130, %s131
      %p143 = scmp.eq.s32.totalorder %s32, 1
      %p144 = por %p142, %p143
      %p146 = scmp.ne.s32.totalorder %s131, %s145
      %p147 = scmp.eq.s32.totalorder %s32, 0
      %p148 = por %p146, %p147
      %s150 = sadd.s32 %s149, 1
      %p153 = scmp.eq.s32.totalorder %s26, 1
      %p154 = scmp.ne.s32.totalorder %s149, %s151
      %p155 = scmp.eq.s32.totalorder %s26, 0
      %p156 = por %p154, %p155
      %p157 = scmp.ne.s32.totalorder %s149, %s151
      %p158 = scmp.eq.s32.totalorder %s31, 1
      %p159 = por %p157, %p158
      %p160 = scmp.ne.s32.totalorder %s151, %s152
      %p161 = scmp.eq.s32.totalorder %s31, 0
      %p162 = por %p160, %p161
      %p163 = scmp.ne.s32.totalorder %s151, %s152
      %p164 = scmp.eq.s32.totalorder %s32, 1
      %p165 = por %p163, %p164
      %p167 = scmp.ne.s32.totalorder %s152, %s166
      %p168 = scmp.eq.s32.totalorder %s32, 0
      %p169 = por %p167, %p168
      %s171 = sadd.s32 %s170, 1
      %p174 = scmp.eq.s32.totalorder %s26, 1
      %p175 = scmp.ne.s32.totalorder %s170, %s172
      %p176 = scmp.eq.s32.totalorder %s26, 0
      %p177 = por %p175, %p176
      %p178 = scmp.ne.s32.totalorder %s170, %s172
      %p179 = scmp.eq.s32.totalorder %s31, 1
      %p180 = por %p178, %p179
      %p181 = scmp.ne.s32.totalorder %s172, %s173
      %p182 = scmp.eq.s32.totalorder %s31, 0
      %p183 = por %p181, %p182
      %p184 = scmp.ne.s32.totalorder %s172, %s173
      %p185 = scmp.eq.s32.totalorder %s32, 1
      %p186 = por %p184, %p185
      %p188 = scmp.ne.s32.totalorder %s173, %s187
      %p189 = scmp.eq.s32.totalorder %s32, 0
      %p190 = por %p188, %p189
      %s192 = sadd.s32 %s191, 1
      %p195 = scmp.eq.s32.totalorder %s26, 1
      %p196 = scmp.ne.s32.totalorder %s191, %s193
      %p197 = scmp.eq.s32.totalorder %s26, 0
      %p198 = por %p196, %p197
      %p199 = scmp.ne.s32.totalorder %s191, %s193
      %p200 = scmp.eq.s32.totalorder %s31, 1
      %p201 = por %p199, %p200
      %p202 = scmp.ne.s32.totalorder %s193, %s194
      %p203 = scmp.eq.s32.totalorder %s31, 0
      %p204 = por %p202, %p203
      %p205 = scmp.ne.s32.totalorder %s193, %s194
      %p206 = scmp.eq.s32.totalorder %s32, 1
      %p207 = por %p205, %p206
      %p209 = scmp.ne.s32.totalorder %s194, %s208
      %p210 = scmp.eq.s32.totalorder %s32, 0
      %p211 = por %p209, %p210
      %s213 = sadd.s32 %s212, 1
      %p216 = scmp.eq.s32.totalorder %s26, 1
      %p217 = scmp.ne.s32.totalorder %s212, %s214
      %p218 = scmp.eq.s32.totalorder %s26, 0
      %p219 = por %p217, %p218
      %p220 = scmp.ne.s32.totalorder %s212, %s214
      %p221 = scmp.eq.s32.totalorder %s31, 1
      %p222 = por %p220, %p221
      %p223 = scmp.ne.s32.totalorder %s214, %s215
      %p224 = scmp.eq.s32.totalorder %s31, 0
      %p225 = por %p223, %p224
      %p226 = scmp.ne.s32.totalorder %s214, %s215
      %p227 = scmp.eq.s32.totalorder %s32, 1
      %p228 = por %p226, %p227
      %p230 = scmp.ne.s32.totalorder %s215, %s229
      %p231 = scmp.eq.s32.totalorder %s32, 0
      %p232 = por %p230, %p231
      %s234 = sadd.s32 %s233, 1
      %p237 = scmp.eq.s32.totalorder %s26, 1
      %p238 = scmp.ne.s32.totalorder %s233, %s235
      %p239 = scmp.eq.s32.totalorder %s26, 0
      %p240 = por %p238, %p239
      %p241 = scmp.ne.s32.totalorder %s233, %s235
      %p242 = scmp.eq.s32.totalorder %s31, 1
      %p243 = por %p241, %p242
      %p244 = scmp.ne.s32.totalorder %s235, %s236
      %p245 = scmp.eq.s32.totalorder %s31, 0
      %p246 = por %p244, %p245
      %p247 = scmp.ne.s32.totalorder %s235, %s236
      %p248 = scmp.eq.s32.totalorder %s32, 1
      %p249 = por %p247, %p248
      %p251 = scmp.ne.s32.totalorder %s236, %s250
      %p252 = scmp.eq.s32.totalorder %s32, 0
      %p253 = por %p251, %p252
      %s254 = ssub.s32 %s26, %s33
      %p255 = scmp.eq.s32.totalorder %s254, 0
      %s257 = sadd.s32 %s256, 1
      %s258 = scalar_select %p255, %s256, %s257
      %p261 = pneg %p255
      %p262 = scmp.eq.s32.totalorder %s26, 1
      %p263 = por %p261, %p262
      %p264 = scmp.ne.s32.totalorder %s256, %s259
      %p265 = scmp.eq.s32.totalorder %s26, 0
      %p266 = por %p264, %p265
      %p267 = scmp.ne.s32.totalorder %s256, %s259
      %p268 = scmp.eq.s32.totalorder %s31, 1
      %p269 = por %p267, %p268
      %p270 = scmp.ne.s32.totalorder %s259, %s260
      %p271 = scmp.eq.s32.totalorder %s31, 0
      %p272 = por %p270, %p271
      %p273 = scmp.ne.s32.totalorder %s259, %s260
      %p274 = scmp.eq.s32.totalorder %s32, 1
      %p275 = por %p273, %p274
      %p277 = scmp.ne.s32.totalorder %s260, %s276
      %p278 = scmp.eq.s32.totalorder %s32, 0
      %p279 = por %p277, %p278
      %p280 = scmp.le.s32.totalorder 1, %s26
      %p281 = scmp.lt.s32.totalorder %s26, 3
      %p282 = pnand %p280, %p281
      %p283 = pneg %p282
      // Predicated region
      $region9: #{tpu_custom_call.1} parent=5 // pred_check
        _
      $region10: #{tpu_custom_call.1} parent=5 // pred_check_branch
        %285 = sbr.rel (%p282) target = $region12
      $region11: #{tpu_custom_call.1} parent=5 // pred_region
        %s286 = ssub.s32 %s26, 1
        // Predicated region
        $region13: #{tpu_custom_call.1} parent=11 // pred_check
          %p287 = pneg %p99
        $region14: #{tpu_custom_call.1} parent=11 // pred_check_branch
          %289 = sbr.rel (%p287) target = $region16
        $region15: #{tpu_custom_call.1} parent=11 // pred_region
          %s291 = ssub.s32 1024, 1024
          %292 = vsyncadd [#allocation6], %s291
          %s293 = sshll.u32 [#allocation7], 4
          %s294 = int_to_ptr.vmem [resolvable:$true] %s293
          %299 = dma.hbm_to_vmem [thread:$0]  %s2, 1024, %s294, [#allocation6], 64, 64, 4
        $region16: #{tpu_custom_call.1} parent=11 // pred_fallthru
          _
        // Predicated region
        $region17: #{tpu_custom_call.1} parent=11 // pred_check
          %p300 = pneg %p120
        $region18: #{tpu_custom_call.1} parent=11 // pred_check_branch
          %302 = sbr.rel (%p300) target = $region20
        $region19: #{tpu_custom_call.1} parent=11 // pred_region
          _
        $region20: #{tpu_custom_call.1} parent=11 // pred_fallthru
          _
        // Predicated region
        $region21: #{tpu_custom_call.1} parent=11 // pred_check
          %p303 = pneg %p141
        $region22: #{tpu_custom_call.1} parent=11 // pred_check_branch
          %305 = sbr.rel (%p303) target = $region24
        $region23: #{tpu_custom_call.1} parent=11 // pred_region
          %s307 = ssub.s32 2048, 2048
          %308 = vsyncadd [#allocation9], %s307
          %s309 = sshll.u32 [#allocation8], 4
          %s310 = int_to_ptr.vmem [resolvable:$true] %s309
          %315 = dma.hbm_to_vmem [thread:$0]  %s4, 2048, %s310, [#allocation9], 128, 128, 8
        $region24: #{tpu_custom_call.1} parent=11 // pred_fallthru
          _
        // Predicated region
        $region25: #{tpu_custom_call.1} parent=11 // pred_check
          %p316 = pneg %p162
        $region26: #{tpu_custom_call.1} parent=11 // pred_check_branch
          %318 = sbr.rel (%p316) target = $region28
        $region27: #{tpu_custom_call.1} parent=11 // pred_region
          _
        $region28: #{tpu_custom_call.1} parent=11 // pred_fallthru
          _
        // Predicated region
        $region29: #{tpu_custom_call.1} parent=11 // pred_check
          %p319 = pneg %p183
        $region30: #{tpu_custom_call.1} parent=11 // pred_check_branch
          %321 = sbr.rel (%p319) target = $region32
        $region31: #{tpu_custom_call.1} parent=11 // pred_region
          %s323 = ssub.s32 1024, 1024
          %324 = vsyncadd [#allocation9], %s323
          %s325 = sshll.u32 [#allocation10], 4
          %s326 = int_to_ptr.vmem [resolvable:$true] %s325
          %331 = dma.hbm_to_vmem [thread:$0]  %s6, 1024, %s326, [#allocation9], 64, 64, 4
        $region32: #{tpu_custom_call.1} parent=11 // pred_fallthru
          _
        // Predicated region
        $region33: #{tpu_custom_call.1} parent=11 // pred_check
          %p332 = pneg %p204
        $region34: #{tpu_custom_call.1} parent=11 // pred_check_branch
          %334 = sbr.rel (%p332) target = $region36
        $region35: #{tpu_custom_call.1} parent=11 // pred_region
          _
        $region36: #{tpu_custom_call.1} parent=11 // pred_fallthru
          _
        // Predicated region
        $region37: #{tpu_custom_call.1} parent=11 // pred_check
          %p335 = pneg %p225
        $region38: #{tpu_custom_call.1} parent=11 // pred_check_branch
          %337 = sbr.rel (%p335) target = $region40
        $region39: #{tpu_custom_call.1} parent=11 // pred_region
          _
        $region40: #{tpu_custom_call.1} parent=11 // pred_fallthru
          _
        // Predicated region
        $region41: #{tpu_custom_call.1} parent=11 // pred_check
          %p338 = pneg %p246
        $region42: #{tpu_custom_call.1} parent=11 // pred_check_branch
          %340 = sbr.rel (%p338) target = $region44
        $region43: #{tpu_custom_call.1} parent=11 // pred_region
          _
        $region44: #{tpu_custom_call.1} parent=11 // pred_fallthru
          _
      $region12: #{tpu_custom_call.1} parent=5 // pred_fallthru
        _
      %p341 = scmp.lt.s32.totalorder %s26, 2
      // Predicated region
      $region45: #{tpu_custom_call.1} parent=5 // pred_check
        %p342 = pneg %p341
      $region46: #{tpu_custom_call.1} parent=5 // pred_check_branch
        %344 = sbr.rel (%p342) target = $region48
      $region47: #{tpu_custom_call.1} parent=5 // pred_region
        // Predicated region
        $region49: #{tpu_custom_call.1} parent=47 // pred_check
          %p345 = pneg %p46
        $region50: #{tpu_custom_call.1} parent=47 // pred_check_branch
          %347 = sbr.rel (%p345) target = $region52
        $region51: #{tpu_custom_call.1} parent=47 // pred_region
          %s348 = sand.u32 %s36, 1
          %s349 = scalar_lea.sflag [#allocation3], %s348
          %s350 = sand.u32 %s36, 1
          %s351 = smul.addr %s350, 4
          %s352 = scalar_lea.vmem [#allocation2], %s351
          %s354 = ssub.s32 64, 64
          %355 = vsyncadd %s349, %s354
          %s356 = smul.addr %s26, 64
          %s357 = scalar_lea.hbm %s0, %s356
          %s359 = sshll.u32 %s352, 4
          %s360 = int_to_ptr.vmem [resolvable:$true] %s359
          %362 = dma.hbm_to_vmem [thread:$0]  %s357, 64, %s360, %s349
        $region52: #{tpu_custom_call.1} parent=47 // pred_fallthru
          _
        // Predicated region
        $region53: #{tpu_custom_call.1} parent=47 // pred_check
          %p363 = pneg %p72
        $region54: #{tpu_custom_call.1} parent=47 // pred_check_branch
          %365 = sbr.rel (%p363) target = $region56
        $region55: #{tpu_custom_call.1} parent=47 // pred_region
          %s366 = sand.u32 %s26, 1
          %s367 = scalar_lea.sflag [#allocation6], %s366
          %s368 = sand.u32 %s62, 1
          %s369 = smul.addr %s368, 4
          %s370 = scalar_lea.vmem [#allocation5], %s369
          %s372 = ssub.s32 64, 64
          %373 = vsyncadd %s367, %s372
          %s374 = smul.addr %s26, 64
          %s375 = scalar_lea.hbm %s1, %s374
          %s377 = sshll.u32 %s370, 4
          %s378 = int_to_ptr.vmem [resolvable:$true] %s377
          %380 = dma.hbm_to_vmem [thread:$0]  %s375, 64, %s378, %s367
        $region56: #{tpu_custom_call.1} parent=47 // pred_fallthru
          _
      $region48: #{tpu_custom_call.1} parent=5 // pred_fallthru
        _
      %p381 = scmp.le.s32.totalorder 1, %s26
      %p382 = scmp.lt.s32.totalorder %s26, 3
      %p383 = pnand %p381, %p382
      %p384 = pneg %p383
      // Predicated region
      $region57: #{tpu_custom_call.1} parent=5 // pred_check
        _
      $region58: #{tpu_custom_call.1} parent=5 // pred_check_branch
        %386 = sbr.rel (%p383) target = $region60
      $region59: #{tpu_custom_call.1} parent=5 // pred_region
        %s387 = ssub.s32 %s26, 1
        %s388 = sand.u32 %s39, 1
        %s389 = scalar_lea.sflag [#allocation3], %s388
        %s390 = sand.u32 %s39, 1
        %s391 = smul.addr %s390, 4
        %s392 = scalar_lea.vmem [#allocation2], %s391
        // Predicated region
        $region61: #{tpu_custom_call.1} parent=59 // pred_check
          %p393 = pneg %p52
        $region62: #{tpu_custom_call.1} parent=59 // pred_check_branch
          %395 = sbr.rel (%p393) target = $region64
        $region63: #{tpu_custom_call.1} parent=59 // pred_region
          %396 = dma.done %s389, 64
        $region64: #{tpu_custom_call.1} parent=59 // pred_fallthru
          _
        %s397 = sand.u32 %s31, 1
        %s398 = scalar_lea.sflag [#allocation6], %s397
        %s399 = sand.u32 %s65, 1
        %s400 = smul.addr %s399, 4
        %s401 = scalar_lea.vmem [#allocation5], %s400
        // Predicated region
        $region65: #{tpu_custom_call.1} parent=59 // pred_check
          %p402 = pneg %p78
        $region66: #{tpu_custom_call.1} parent=59 // pred_check_branch
          %404 = sbr.rel (%p402) target = $region68
        $region67: #{tpu_custom_call.1} parent=59 // pred_region
          %405 = dma.done %s398, 64
        $region68: #{tpu_custom_call.1} parent=59 // pred_fallthru
          _
        // Predicated region
        $region69: #{tpu_custom_call.1} parent=59 // pred_check
          %p406 = pneg %p99
        $region70: #{tpu_custom_call.1} parent=59 // pred_check_branch
          %408 = sbr.rel (%p406) target = $region72
        $region71: #{tpu_custom_call.1} parent=59 // pred_region
          %409 = dma.done [#allocation6], 1024
        $region72: #{tpu_custom_call.1} parent=59 // pred_fallthru
          _
        // Predicated region
        $region73: #{tpu_custom_call.1} parent=59 // pred_check
          %p410 = pneg %p141
        $region74: #{tpu_custom_call.1} parent=59 // pred_check_branch
          %412 = sbr.rel (%p410) target = $region76
        $region75: #{tpu_custom_call.1} parent=59 // pred_region
          %413 = dma.done [#allocation9], 2048
        $region76: #{tpu_custom_call.1} parent=59 // pred_fallthru
          _
        // Predicated region
        $region77: #{tpu_custom_call.1} parent=59 // pred_check
          %p414 = pneg %p183
        $region78: #{tpu_custom_call.1} parent=59 // pred_check_branch
          %416 = sbr.rel (%p414) target = $region80
        $region79: #{tpu_custom_call.1} parent=59 // pred_region
          %417 = dma.done [#allocation9], 1024
        $region80: #{tpu_custom_call.1} parent=59 // pred_fallthru
          _
        %s418 = sand.u32 %s39, 1
        %s419 = scalar_lea.sflag [#allocation3], %s418
        %s420 = sand.u32 %s39, 1
        %s421 = smul.addr %s420, 4
        %s422 = scalar_lea.vmem [#allocation2], %s421
        %p423 = pneg %p52
        %p424 = pneg %p49
        %s425 = sand.u32 %s31, 1
        %s426 = scalar_lea.sflag [#allocation6], %s425
        %s427 = sand.u32 %s65, 1
        %s428 = smul.addr %s427, 4
        %s429 = scalar_lea.vmem [#allocation5], %s428
        %p430 = pneg %p78
        %p431 = pneg %p75
        %p432 = pneg %p99
        %p433 = pneg %p96
        %p434 = pneg %p120
        %p435 = pneg %p117
        %p436 = pneg %p141
        %p437 = pneg %p138
        %p438 = pneg %p162
        %p439 = pneg %p159
        %p440 = pneg %p183
        %p441 = pneg %p180
        %p442 = pneg %p204
        %p443 = pneg %p201
        %p444 = pneg %p225
        %p445 = pneg %p222
        %p446 = pneg %p246
        %p447 = pneg %p243
        %p448 = pneg %p272
        %p449 = pneg %p269
        %s450 = sand.u32 %s259, 1
        %s451 = scalar_lea.sflag [#allocation4], %s450
        %s452 = sand.u32 %s259, 1
        %s453 = smul.addr %s452, 4
        %s454 = scalar_lea.vmem [#allocation11], %s453
        %v456 = vld [vmem:[%s392] sm:$0xf]
        %v457 = vld [vmem:[%s401] sm:$0xf]
        %v458 = vunpack.c.l.bf16 %v456
        %v459 = vld [vmem:[#allocation7] sm:$0xf]
        %v460 = vld [vmem:[#allocation7 + $0x4] sm:$0xf]
        %v461 = vld [vmem:[#allocation7 + $0x8] sm:$0xf]
        %v462 = vld [vmem:[#allocation7 + $0xc] sm:$0xf]
        %v463 = vld [vmem:[#allocation7 + $0x10] sm:$0xf]
        %v464 = vld [vmem:[#allocation7 + $0x14] sm:$0xf]
        %v465 = vld [vmem:[#allocation7 + $0x18] sm:$0xf]
        %v466 = vld [vmem:[#allocation7 + $0x1c] sm:$0xf]
        %v467 = vld [vmem:[#allocation7 + $0x20] sm:$0xf]
        %v468 = vld [vmem:[#allocation7 + $0x24] sm:$0xf]
        %v469 = vld [vmem:[#allocation7 + $0x28] sm:$0xf]
        %v470 = vld [vmem:[#allocation7 + $0x2c] sm:$0xf]
        %v471 = vld [vmem:[#allocation7 + $0x30] sm:$0xf]
        %v472 = vld [vmem:[#allocation7 + $0x34] sm:$0xf]
        %v473 = vld [vmem:[#allocation7 + $0x38] sm:$0xf]
        %v474 = vld [vmem:[#allocation7 + $0x3c] sm:$0xf]
        %v475 = vld [vmem:[%s3] sm:$0x1]
        %v477 = vlaneseq
        %v478 = vshrl.u32 %v477, 7
        %v479 = vsub.s32 0, %v478
        %v480 = vrot.slane %v475, %v479
        %v498 = vunpack.c.l.b16 %v459
        %v499 = vunpack.c.l.b16 %v460
        %v500 = vunpack.c.l.b16 %v461
        %v501 = vunpack.c.l.b16 %v462
        %v502 = vunpack.c.l.b16 %v463
        %v503 = vunpack.c.l.b16 %v464
        %v504 = vunpack.c.l.b16 %v465
        %v505 = vunpack.c.l.b16 %v466
        %v506 = vunpack.c.l.b16 %v467
        %v507 = vunpack.c.l.b16 %v468
        %v508 = vunpack.c.l.b16 %v469
        %v509 = vunpack.c.l.b16 %v470
        %v510 = vunpack.c.l.b16 %v471
        %v511 = vunpack.c.l.b16 %v472
        %v512 = vunpack.c.l.b16 %v473
        %v513 = vunpack.c.l.b16 %v474
        %v514 = vpack.c.b16 %v499, %v498
        %v515 = vpack.c.b16 %v501, %v500
        %v516 = vpack.c.b16 %v503, %v502
        %v517 = vpack.c.b16 %v505, %v504
        %v518 = vpack.c.b16 %v507, %v506
        %v519 = vpack.c.b16 %v509, %v508
        %v520 = vpack.c.b16 %v511, %v510
        %v521 = vpack.c.b16 %v513, %v512
        %530 = vmatprep.subr.bf16.mxu0 0
        %531 = vmatpush1.bf16.msra.mxu0 %v521
        %532 = vmatprep.subr.bf16.mxu0 0
        %533 = vmatpush1.bf16.msra.mxu0 %v520
        %534 = vmatprep.subr.bf16.mxu0 0
        %535 = vmatpush1.bf16.msra.mxu0 %v519
        %536 = vmatprep.subr.bf16.mxu0 0
        %537 = vmatpush1.bf16.msra.mxu0 %v518
        %538 = vmatprep.subr.bf16.mxu0 0
        %539 = vmatpush1.bf16.msra.mxu0 %v517
        %540 = vmatprep.subr.bf16.mxu0 0
        %541 = vmatpush1.bf16.msra.mxu0 %v516
        %542 = vmatprep.subr.bf16.mxu0 0
        %543 = vmatpush1.bf16.msra.mxu0 %v515
        %544 = vmatprep.subr.bf16.mxu0 0
        %545 = vmatpush1.bf16.msra.mxu0 %v514
        %546 = vmatprep.subr.bf16.mxu0 0
        %547 = vmatpush2.bf16.msra.mxu0 0
        %548 = vmatprep.subr.bf16.mxu0 0
        %549 = vmatpush2.bf16.msra.mxu0 0
        %550 = vmatprep.subr.bf16.mxu0 0
        %551 = vmatpush2.bf16.msra.mxu0 0
        %552 = vmatprep.subr.bf16.mxu0 0
        %553 = vmatpush2.bf16.msra.mxu0 0
        %554 = vmatprep.subr.bf16.mxu0 0
        %555 = vmatpush2.bf16.msra.mxu0 0
        %556 = vmatprep.subr.bf16.mxu0 0
        %557 = vmatpush2.bf16.msra.mxu0 0
        %558 = vmatprep.subr.bf16.mxu0 0
        %559 = vmatpush2.bf16.msra.mxu0 0
        %560 = vmatprep.subr.bf16.mxu0 0
        %561 = vmatpush2.bf16.msra.mxu0 0
        %562 = vmatprep.mubr.bf16.mxu0 0
        %563 = vmatmul.mubr.bf16.gmra.mxu0 %v456
        %v564 = vpop.f32.mrf.mxu0
        %v565 = vadd.f32 %v480, %v564
        %v566 = vpop.f32.mrf.mxu0
        %v567 = vpop.f32.mrf.mxu0
        %v568 = vpop.f32.mrf.mxu0
        %569 = vdwg.mxu0
        %v570 = vmul.f32 %v565, 0.17677669
        %v571 = vld [vmem:[#allocation8] sm:$0xff]
        %v572 = vld [vmem:[#allocation8 + $0x8] sm:$0xff]
        %v573 = vld [vmem:[#allocation8 + $0x10] sm:$0xff]
        %v574 = vld [vmem:[#allocation8 + $0x18] sm:$0xff]
        %v575 = vld [vmem:[#allocation8 + $0x20] sm:$0xff]
        %v576 = vld [vmem:[#allocation8 + $0x28] sm:$0xff]
        %v577 = vld [vmem:[#allocation8 + $0x30] sm:$0xff]
        %v578 = vld [vmem:[#allocation8 + $0x38] sm:$0xff]
        %v579 = vld [vmem:[#allocation8 + $0x40] sm:$0xff]
        %v580 = vld [vmem:[#allocation8 + $0x48] sm:$0xff]
        %v581 = vld [vmem:[#allocation8 + $0x50] sm:$0xff]
        %v582 = vld [vmem:[#allocation8 + $0x58] sm:$0xff]
        %v583 = vld [vmem:[#allocation8 + $0x60] sm:$0xff]
        %v584 = vld [vmem:[#allocation8 + $0x68] sm:$0xff]
        %v585 = vld [vmem:[#allocation8 + $0x70] sm:$0xff]
        %v586 = vld [vmem:[#allocation8 + $0x78] sm:$0xff]
        %v587 = vld [vmem:[%s5] sm:$0x3]
        %v589 = vlaneseq
        %v590 = vshrl.u32 %v589, 7
        %v591 = vsub.s32 0, %v590
        %v592 = vrot.slane %v587, %v591
        %v593 = vlaneseq
        %v594 = vshrl.u32 %v593, 7
        %v595 = vsub.s32 1, %v594
        %v596 = vrot.slane %v587, %v595
        %v615 = vunpack.c.l.b16 %v571
        %v616 = vunpack.c.h.b16 %v571
        %v617 = vunpack.c.l.b16 %v572
        %v618 = vunpack.c.h.b16 %v572
        %v619 = vunpack.c.l.b16 %v573
        %v620 = vunpack.c.h.b16 %v573
        %v621 = vunpack.c.l.b16 %v574
        %v622 = vunpack.c.h.b16 %v574
        %v623 = vunpack.c.l.b16 %v575
        %v624 = vunpack.c.h.b16 %v575
        %v625 = vunpack.c.l.b16 %v576
        %v626 = vunpack.c.h.b16 %v576
        %v627 = vunpack.c.l.b16 %v577
        %v628 = vunpack.c.h.b16 %v577
        %v629 = vunpack.c.l.b16 %v578
        %v630 = vunpack.c.h.b16 %v578
        %v631 = vunpack.c.l.b16 %v579
        %v632 = vunpack.c.h.b16 %v579
        %v633 = vunpack.c.l.b16 %v580
        %v634 = vunpack.c.h.b16 %v580
        %v635 = vunpack.c.l.b16 %v581
        %v636 = vunpack.c.h.b16 %v581
        %v637 = vunpack.c.l.b16 %v582
        %v638 = vunpack.c.h.b16 %v582
        %v639 = vunpack.c.l.b16 %v583
        %v640 = vunpack.c.h.b16 %v583
        %v641 = vunpack.c.l.b16 %v584
        %v642 = vunpack.c.h.b16 %v584
        %v643 = vunpack.c.l.b16 %v585
        %v644 = vunpack.c.h.b16 %v585
        %v645 = vunpack.c.l.b16 %v586
        %v646 = vunpack.c.h.b16 %v586
        %v647 = vpack.c.b16 %v617, %v615
        %v648 = vpack.c.b16 %v618, %v616
        %v649 = vpack.c.b16 %v621, %v619
        %v650 = vpack.c.b16 %v622, %v620
        %v651 = vpack.c.b16 %v625, %v623
        %v652 = vpack.c.b16 %v626, %v624
        %v653 = vpack.c.b16 %v629, %v627
        %v654 = vpack.c.b16 %v630, %v628
        %v655 = vpack.c.b16 %v633, %v631
        %v656 = vpack.c.b16 %v634, %v632
        %v657 = vpack.c.b16 %v637, %v635
        %v658 = vpack.c.b16 %v638, %v636
        %v659 = vpack.c.b16 %v641, %v639
        %v660 = vpack.c.b16 %v642, %v640
        %v661 = vpack.c.b16 %v645, %v643
        %v662 = vpack.c.b16 %v646, %v644
        %679 = vmatprep.subr.bf16.mxu0 %v662
        %680 = vmatpush1.bf16.msra.mxu0 %v661
        %681 = vmatprep.subr.bf16.mxu0 %v660
        %682 = vmatpush1.bf16.msra.mxu0 %v659
        %683 = vmatprep.subr.bf16.mxu0 %v658
        %684 = vmatpush1.bf16.msra.mxu0 %v657
        %685 = vmatprep.subr.bf16.mxu0 %v656
        %686 = vmatpush1.bf16.msra.mxu0 %v655
        %687 = vmatprep.subr.bf16.mxu0 %v654
        %688 = vmatpush1.bf16.msra.mxu0 %v653
        %689 = vmatprep.subr.bf16.mxu0 %v652
        %690 = vmatpush1.bf16.msra.mxu0 %v651
        %691 = vmatprep.subr.bf16.mxu0 %v650
        %692 = vmatpush1.bf16.msra.mxu0 %v649
        %693 = vmatprep.subr.bf16.mxu0 %v648
        %694 = vmatpush1.bf16.msra.mxu0 %v647
        %695 = vmatprep.subr.bf16.mxu0 0
        %696 = vmatpush2.bf16.msra.mxu0 0
        %697 = vmatprep.subr.bf16.mxu0 0
        %698 = vmatpush2.bf16.msra.mxu0 0
        %699 = vmatprep.subr.bf16.mxu0 0
        %700 = vmatpush2.bf16.msra.mxu0 0
        %701 = vmatprep.subr.bf16.mxu0 0
        %702 = vmatpush2.bf16.msra.mxu0 0
        %703 = vmatprep.subr.bf16.mxu0 0
        %704 = vmatpush2.bf16.msra.mxu0 0
        %705 = vmatprep.subr.bf16.mxu0 0
        %706 = vmatpush2.bf16.msra.mxu0 0
        %707 = vmatprep.subr.bf16.mxu0 0
        %708 = vmatpush2.bf16.msra.mxu0 0
        %709 = vmatprep.subr.bf16.mxu0 0
        %710 = vmatpush2.bf16.msra.mxu0 0
        %711 = vmatprep.mubr.bf16.mxu0 0
        %712 = vmatmul.mubr.bf16.gmra.mxu0 %v457
        %v713 = vpop.f32.mrf.mxu0
        %v714 = vadd.f32 %v592, %v713
        %v715 = vpop.f32.mrf.mxu0
        %v716 = vadd.f32 %v596, %v715
        %v717 = vpop.f32.mrf.mxu0
        %v718 = vpop.f32.mrf.mxu0
        %719 = vdwg.mxu0
        %v720 = vpack.c.bf16 %v570, %v570
        %v721 = vpack.c.bf16 %v714, %v714
        %v722 = vpack.c.bf16 %v716, %v716
        %vm723 = vcmask 261120
        %v725 = vsel %vm723, %v720, 0
        %v728 = vsel %vm723, %v721, 0
        %730 = vmatprep.subr.bf16.mxu0 0
        %731 = vmatpush1.bf16.xpose.msra.mxu0 0
        %732 = vmatprep.subr.bf16.mxu0 0
        %733 = vmatpush1.bf16.xpose.msra.mxu0 0
        %734 = vmatprep.subr.bf16.mxu0 0
        %735 = vmatpush1.bf16.xpose.msra.mxu0 0
        %736 = vmatprep.subr.bf16.mxu0 0
        %737 = vmatpush1.bf16.xpose.msra.mxu0 0
        %738 = vmatprep.subr.bf16.mxu0 0
        %739 = vmatpush1.bf16.xpose.msra.mxu0 0
        %740 = vmatprep.subr.bf16.mxu0 0
        %741 = vmatpush1.bf16.xpose.msra.mxu0 0
        %742 = vmatprep.subr.bf16.mxu0 0
        %743 = vmatpush1.bf16.xpose.msra.mxu0 0
        %744 = vmatprep.subr.bf16.mxu0 0
        %745 = vmatpush1.bf16.xpose.msra.mxu0 %v728
        %746 = vmatprep.subr.bf16.mxu0 0
        %747 = vmatpush2.bf16.xpose.msra.mxu0 0
        %748 = vmatprep.subr.bf16.mxu0 0
        %749 = vmatpush2.bf16.xpose.msra.mxu0 0
        %750 = vmatprep.subr.bf16.mxu0 0
        %751 = vmatpush2.bf16.xpose.msra.mxu0 0
        %752 = vmatprep.subr.bf16.mxu0 0
        %753 = vmatpush2.bf16.xpose.msra.mxu0 0
        %754 = vmatprep.subr.bf16.mxu0 0
        %755 = vmatpush2.bf16.xpose.msra.mxu0 0
        %756 = vmatprep.subr.bf16.mxu0 0
        %757 = vmatpush2.bf16.xpose.msra.mxu0 0
        %758 = vmatprep.subr.bf16.mxu0 0
        %759 = vmatpush2.bf16.xpose.msra.mxu0 0
        %760 = vmatprep.subr.bf16.mxu0 0
        %761 = vmatpush2.bf16.xpose.msra.mxu0 0
        %762 = vmatprep.mubr.bf16.mxu0 0
        %763 = vmatmul.mubr.bf16.gmra.mxu0 %v725
        %v764 = vpop.f32.mrf.mxu0
        %v765 = vadd.f32 0.0, %v764
        %v766 = vpop.f32.mrf.mxu0
        %v767 = vpop.f32.mrf.mxu0
        %v768 = vpop.f32.mrf.mxu0
        %769 = vdwg.mxu0
        %v770 = vlaneseq
        %v771 = vshrl.u32 %v770, 7
        %v772 = vlaneseq
        %v773 = vand.u32 %v772, 127
        %vm774 = vcmp.le.s32.totalorder %v773, %v771
        %v775 = vsel %vm774, %v765, -1e+10
        %vm776 = vcmask 64512
        %v777 = vsel %vm776, %v775, -inf
        %778 = vmax.xlane.f32.xlu0 %v777
        %v779 = vpop.xlane.xlu0 %778
        %v780 = vsub.f32 %v775, %v779
        %v781 = vmul.f32 %v780, 1.442695
        %v782 = vpow.pop %v781
        %v783 = vsel %vm776, %v782, 0.0
        %784 = vadd.xlane.f32.xlu0 %v783
        %v785 = vpop.xlane.xlu0 %784
        %v786 = vrcp.pop %v785
        %v787 = vmul.f32 %v782, %v786
        %v788 = vpack.c.bf16 %v787, %v787
        %v790 = vsel %vm776, %v788, 0
        %vm792 = vcmask 1043456
        %v794 = vsel %vm792, %v722, 0
        %796 = vmatprep.subr.bf16.mxu0 0
        %797 = vmatpush1.bf16.msra.mxu0 0
        %798 = vmatprep.subr.bf16.mxu0 0
        %799 = vmatpush1.bf16.msra.mxu0 0
        %800 = vmatprep.subr.bf16.mxu0 0
        %801 = vmatpush1.bf16.msra.mxu0 0
        %802 = vmatprep.subr.bf16.mxu0 0
        %803 = vmatpush1.bf16.msra.mxu0 0
        %804 = vmatprep.subr.bf16.mxu0 0
        %805 = vmatpush1.bf16.msra.mxu0 0
        %806 = vmatprep.subr.bf16.mxu0 0
        %807 = vmatpush1.bf16.msra.mxu0 0
        %808 = vmatprep.subr.bf16.mxu0 0
        %809 = vmatpush1.bf16.msra.mxu0 0
        %810 = vmatprep.subr.bf16.mxu0 0
        %811 = vmatpush1.bf16.msra.mxu0 %v794
        %812 = vmatprep.subr.bf16.mxu0 0
        %813 = vmatpush2.bf16.msra.mxu0 0
        %814 = vmatprep.subr.bf16.mxu0 0
        %815 = vmatpush2.bf16.msra.mxu0 0
        %816 = vmatprep.subr.bf16.mxu0 0
        %817 = vmatpush2.bf16.msra.mxu0 0
        %818 = vmatprep.subr.bf16.mxu0 0
        %819 = vmatpush2.bf16.msra.mxu0 0
        %820 = vmatprep.subr.bf16.mxu0 0
        %821 = vmatpush2.bf16.msra.mxu0 0
        %822 = vmatprep.subr.bf16.mxu0 0
        %823 = vmatpush2.bf16.msra.mxu0 0
        %824 = vmatprep.subr.bf16.mxu0 0
        %825 = vmatpush2.bf16.msra.mxu0 0
        %826 = vmatprep.subr.bf16.mxu0 0
        %827 = vmatpush2.bf16.msra.mxu0 0
        %828 = vmatprep.mubr.bf16.mxu0 0
        %829 = vmatmul.mubr.bf16.gmra.mxu0 %v790
        %v830 = vpop.f32.mrf.mxu0
        %v831 = vadd.f32 0.0, %v830
        %v832 = vpop.f32.mrf.mxu0
        %v833 = vpop.f32.mrf.mxu0
        %v834 = vpop.f32.mrf.mxu0
        %835 = vdwg.mxu0
        %837 = vrot.lane.b32.xlu0 %v720, 96
        %v838 = vpop.permute.xlu0 %837
        %840 = vrot.lane.b32.xlu0 %v721, 96
        %v841 = vpop.permute.xlu0 %840
        %v843 = vsel %vm723, %v838, 0
        %v846 = vsel %vm723, %v841, 0
        %848 = vmatprep.subr.bf16.mxu0 0
        %849 = vmatpush1.bf16.xpose.msra.mxu0 0
        %850 = vmatprep.subr.bf16.mxu0 0
        %851 = vmatpush1.bf16.xpose.msra.mxu0 0
        %852 = vmatprep.subr.bf16.mxu0 0
        %853 = vmatpush1.bf16.xpose.msra.mxu0 0
        %854 = vmatprep.subr.bf16.mxu0 0
        %855 = vmatpush1.bf16.xpose.msra.mxu0 0
        %856 = vmatprep.subr.bf16.mxu0 0
        %857 = vmatpush1.bf16.xpose.msra.mxu0 0
        %858 = vmatprep.subr.bf16.mxu0 0
        %859 = vmatpush1.bf16.xpose.msra.mxu0 0
        %860 = vmatprep.subr.bf16.mxu0 0
        %861 = vmatpush1.bf16.xpose.msra.mxu0 0
        %862 = vmatprep.subr.bf16.mxu0 0
        %863 = vmatpush1.bf16.xpose.msra.mxu0 %v846
        %864 = vmatprep.subr.bf16.mxu0 0
        %865 = vmatpush2.bf16.xpose.msra.mxu0 0
        %866 = vmatprep.subr.bf16.mxu0 0
        %867 = vmatpush2.bf16.xpose.msra.mxu0 0
        %868 = vmatprep.subr.bf16.mxu0 0
        %869 = vmatpush2.bf16.xpose.msra.mxu0 0
        %870 = vmatprep.subr.bf16.mxu0 0
        %871 = vmatpush2.bf16.xpose.msra.mxu0 0
        %872 = vmatprep.subr.bf16.mxu0 0
        %873 = vmatpush2.bf16.xpose.msra.mxu0 0
        %874 = vmatprep.subr.bf16.mxu0 0
        %875 = vmatpush2.bf16.xpose.msra.mxu0 0
        %876 = vmatprep.subr.bf16.mxu0 0
        %877 = vmatpush2.bf16.xpose.msra.mxu0 0
        %878 = vmatprep.subr.bf16.mxu0 0
        %879 = vmatpush2.bf16.xpose.msra.mxu0 0
        %880 = vmatprep.mubr.bf16.mxu0 0
        %881 = vmatmul.mubr.bf16.gmra.mxu0 %v843
        %v882 = vpop.f32.mrf.mxu0
        %v883 = vadd.f32 0.0, %v882
        %v884 = vpop.f32.mrf.mxu0
        %v885 = vpop.f32.mrf.mxu0
        %v886 = vpop.f32.mrf.mxu0
        %887 = vdwg.mxu0
        %v888 = vsel %vm774, %v883, -1e+10
        %v889 = vsel %vm776, %v888, -inf
        %890 = vmax.xlane.f32.xlu0 %v889
        %v891 = vpop.xlane.xlu0 %890
        %v892 = vsub.f32 %v888, %v891
        %v893 = vmul.f32 %v892, 1.442695
        %v894 = vpow.pop %v893
        %v895 = vsel %vm776, %v894, 0.0
        %896 = vadd.xlane.f32.xlu0 %v895
        %v897 = vpop.xlane.xlu0 %896
        %v898 = vrcp.pop %v897
        %v899 = vmul.f32 %v894, %v898
        %v900 = vpack.c.bf16 %v899, %v899
        %902 = vrot.lane.b32.xlu0 %v722, 96
        %v903 = vpop.permute.xlu0 %902
        %v905 = vsel %vm776, %v900, 0
        %v908 = vsel %vm792, %v903, 0
        %910 = vmatprep.subr.bf16.mxu0 0
        %911 = vmatpush1.bf16.msra.mxu0 0
        %912 = vmatprep.subr.bf16.mxu0 0
        %913 = vmatpush1.bf16.msra.mxu0 0
        %914 = vmatprep.subr.bf16.mxu0 0
        %915 = vmatpush1.bf16.msra.mxu0 0
        %916 = vmatprep.subr.bf16.mxu0 0
        %917 = vmatpush1.bf16.msra.mxu0 0
        %918 = vmatprep.subr.bf16.mxu0 0
        %919 = vmatpush1.bf16.msra.mxu0 0
        %920 = vmatprep.subr.bf16.mxu0 0
        %921 = vmatpush1.bf16.msra.mxu0 0
        %922 = vmatprep.subr.bf16.mxu0 0
        %923 = vmatpush1.bf16.msra.mxu0 0
        %924 = vmatprep.subr.bf16.mxu0 0
        %925 = vmatpush1.bf16.msra.mxu0 %v908
        %926 = vmatprep.subr.bf16.mxu0 0
        %927 = vmatpush2.bf16.msra.mxu0 0
        %928 = vmatprep.subr.bf16.mxu0 0
        %929 = vmatpush2.bf16.msra.mxu0 0
        %930 = vmatprep.subr.bf16.mxu0 0
        %931 = vmatpush2.bf16.msra.mxu0 0
        %932 = vmatprep.subr.bf16.mxu0 0
        %933 = vmatpush2.bf16.msra.mxu0 0
        %934 = vmatprep.subr.bf16.mxu0 0
        %935 = vmatpush2.bf16.msra.mxu0 0
        %936 = vmatprep.subr.bf16.mxu0 0
        %937 = vmatpush2.bf16.msra.mxu0 0
        %938 = vmatprep.subr.bf16.mxu0 0
        %939 = vmatpush2.bf16.msra.mxu0 0
        %940 = vmatprep.subr.bf16.mxu0 0
        %941 = vmatpush2.bf16.msra.mxu0 0
        %942 = vmatprep.mubr.bf16.mxu0 0
        %943 = vmatmul.mubr.bf16.gmra.mxu0 %v905
        %v944 = vpop.f32.mrf.mxu0
        %v945 = vadd.f32 0.0, %v944
        %v946 = vpop.f32.mrf.mxu0
        %v947 = vpop.f32.mrf.mxu0
        %v948 = vpop.f32.mrf.mxu0
        %949 = vdwg.mxu0
        %950 = vrot.lane.b32.xlu0 %v720, 64
        %v951 = vpop.permute.xlu0 %950
        %952 = vrot.lane.b32.xlu0 %v721, 64
        %v953 = vpop.permute.xlu0 %952
        %v955 = vsel %vm723, %v951, 0
        %v958 = vsel %vm723, %v953, 0
        %960 = vmatprep.subr.bf16.mxu0 0
        %961 = vmatpush1.bf16.xpose.msra.mxu0 0
        %962 = vmatprep.subr.bf16.mxu0 0
        %963 = vmatpush1.bf16.xpose.msra.mxu0 0
        %964 = vmatprep.subr.bf16.mxu0 0
        %965 = vmatpush1.bf16.xpose.msra.mxu0 0
        %966 = vmatprep.subr.bf16.mxu0 0
        %967 = vmatpush1.bf16.xpose.msra.mxu0 0
        %968 = vmatprep.subr.bf16.mxu0 0
        %969 = vmatpush1.bf16.xpose.msra.mxu0 0
        %970 = vmatprep.subr.bf16.mxu0 0
        %971 = vmatpush1.bf16.xpose.msra.mxu0 0
        %972 = vmatprep.subr.bf16.mxu0 0
        %973 = vmatpush1.bf16.xpose.msra.mxu0 0
        %974 = vmatprep.subr.bf16.mxu0 0
        %975 = vmatpush1.bf16.xpose.msra.mxu0 %v958
        %976 = vmatprep.subr.bf16.mxu0 0
        %977 = vmatpush2.bf16.xpose.msra.mxu0 0
        %978 = vmatprep.subr.bf16.mxu0 0
        %979 = vmatpush2.bf16.xpose.msra.mxu0 0
        %980 = vmatprep.subr.bf16.mxu0 0
        %981 = vmatpush2.bf16.xpose.msra.mxu0 0
        %982 = vmatprep.subr.bf16.mxu0 0
        %983 = vmatpush2.bf16.xpose.msra.mxu0 0
        %984 = vmatprep.subr.bf16.mxu0 0
        %985 = vmatpush2.bf16.xpose.msra.mxu0 0
        %986 = vmatprep.subr.bf16.mxu0 0
        %987 = vmatpush2.bf16.xpose.msra.mxu0 0
        %988 = vmatprep.subr.bf16.mxu0 0
        %989 = vmatpush2.bf16.xpose.msra.mxu0 0
        %990 = vmatprep.subr.bf16.mxu0 0
        %991 = vmatpush2.bf16.xpose.msra.mxu0 0
        %992 = vmatprep.mubr.bf16.mxu0 0
        %993 = vmatmul.mubr.bf16.gmra.mxu0 %v955
        %v994 = vpop.f32.mrf.mxu0
        %v995 = vadd.f32 0.0, %v994
        %v996 = vpop.f32.mrf.mxu0
        %v997 = vpop.f32.mrf.mxu0
        %v998 = vpop.f32.mrf.mxu0
        %999 = vdwg.mxu0
        %v1000 = vsel %vm774, %v995, -1e+10
        %v1001 = vsel %vm776, %v1000, -inf
        %1002 = vmax.xlane.f32.xlu0 %v1001
        %v1003 = vpop.xlane.xlu0 %1002
        %v1004 = vsub.f32 %v1000, %v1003
        %v1005 = vmul.f32 %v1004, 1.442695
        %v1006 = vpow.pop %v1005
        %v1007 = vsel %vm776, %v1006, 0.0
        %1008 = vadd.xlane.f32.xlu0 %v1007
        %v1009 = vpop.xlane.xlu0 %1008
        %v1010 = vrcp.pop %v1009
        %v1011 = vmul.f32 %v1006, %v1010
        %v1012 = vpack.c.bf16 %v1011, %v1011
        %1013 = vrot.lane.b32.xlu0 %v722, 64
        %v1014 = vpop.permute.xlu0 %1013
        %v1016 = vsel %vm776, %v1012, 0
        %v1019 = vsel %vm792, %v1014, 0
        %1021 = vmatprep.subr.bf16.mxu0 0
        %1022 = vmatpush1.bf16.msra.mxu0 0
        %1023 = vmatprep.subr.bf16.mxu0 0
        %1024 = vmatpush1.bf16.msra.mxu0 0
        %1025 = vmatprep.subr.bf16.mxu0 0
        %1026 = vmatpush1.bf16.msra.mxu0 0
        %1027 = vmatprep.subr.bf16.mxu0 0
        %1028 = vmatpush1.bf16.msra.mxu0 0
        %1029 = vmatprep.subr.bf16.mxu0 0
        %1030 = vmatpush1.bf16.msra.mxu0 0
        %1031 = vmatprep.subr.bf16.mxu0 0
        %1032 = vmatpush1.bf16.msra.mxu0 0
        %1033 = vmatprep.subr.bf16.mxu0 0
        %1034 = vmatpush1.bf16.msra.mxu0 0
        %1035 = vmatprep.subr.bf16.mxu0 0
        %1036 = vmatpush1.bf16.msra.mxu0 %v1019
        %1037 = vmatprep.subr.bf16.mxu0 0
        %1038 = vmatpush2.bf16.msra.mxu0 0
        %1039 = vmatprep.subr.bf16.mxu0 0
        %1040 = vmatpush2.bf16.msra.mxu0 0
        %1041 = vmatprep.subr.bf16.mxu0 0
        %1042 = vmatpush2.bf16.msra.mxu0 0
        %1043 = vmatprep.subr.bf16.mxu0 0
        %1044 = vmatpush2.bf16.msra.mxu0 0
        %1045 = vmatprep.subr.bf16.mxu0 0
        %1046 = vmatpush2.bf16.msra.mxu0 0
        %1047 = vmatprep.subr.bf16.mxu0 0
        %1048 = vmatpush2.bf16.msra.mxu0 0
        %1049 = vmatprep.subr.bf16.mxu0 0
        %1050 = vmatpush2.bf16.msra.mxu0 0
        %1051 = vmatprep.subr.bf16.mxu0 0
        %1052 = vmatpush2.bf16.msra.mxu0 0
        %1053 = vmatprep.mubr.bf16.mxu0 0
        %1054 = vmatmul.mubr.bf16.gmra.mxu0 %v1016
        %v1055 = vpop.f32.mrf.mxu0
        %v1056 = vadd.f32 0.0, %v1055
        %v1057 = vpop.f32.mrf.mxu0
        %v1058 = vpop.f32.mrf.mxu0
        %v1059 = vpop.f32.mrf.mxu0
        %1060 = vdwg.mxu0
        %1061 = vrot.lane.b32.xlu0 %v720, 32
        %v1062 = vpop.permute.xlu0 %1061
        %1063 = vrot.lane.b32.xlu0 %v721, 32
        %v1064 = vpop.permute.xlu0 %1063
        %v1066 = vsel %vm723, %v1062, 0
        %v1069 = vsel %vm723, %v1064, 0
        %1071 = vmatprep.subr.bf16.mxu0 0
        %1072 = vmatpush1.bf16.xpose.msra.mxu0 0
        %1073 = vmatprep.subr.bf16.mxu0 0
        %1074 = vmatpush1.bf16.xpose.msra.mxu0 0
        %1075 = vmatprep.subr.bf16.mxu0 0
        %1076 = vmatpush1.bf16.xpose.msra.mxu0 0
        %1077 = vmatprep.subr.bf16.mxu0 0
        %1078 = vmatpush1.bf16.xpose.msra.mxu0 0
        %1079 = vmatprep.subr.bf16.mxu0 0
        %1080 = vmatpush1.bf16.xpose.msra.mxu0 0
        %1081 = vmatprep.subr.bf16.mxu0 0
        %1082 = vmatpush1.bf16.xpose.msra.mxu0 0
        %1083 = vmatprep.subr.bf16.mxu0 0
        %1084 = vmatpush1.bf16.xpose.msra.mxu0 0
        %1085 = vmatprep.subr.bf16.mxu0 0
        %1086 = vmatpush1.bf16.xpose.msra.mxu0 %v1069
        %1087 = vmatprep.subr.bf16.mxu0 0
        %1088 = vmatpush2.bf16.xpose.msra.mxu0 0
        %1089 = vmatprep.subr.bf16.mxu0 0
        %1090 = vmatpush2.bf16.xpose.msra.mxu0 0
        %1091 = vmatprep.subr.bf16.mxu0 0
        %1092 = vmatpush2.bf16.xpose.msra.mxu0 0
        %1093 = vmatprep.subr.bf16.mxu0 0
        %1094 = vmatpush2.bf16.xpose.msra.mxu0 0
        %1095 = vmatprep.subr.bf16.mxu0 0
        %1096 = vmatpush2.bf16.xpose.msra.mxu0 0
        %1097 = vmatprep.subr.bf16.mxu0 0
        %1098 = vmatpush2.bf16.xpose.msra.mxu0 0
        %1099 = vmatprep.subr.bf16.mxu0 0
        %1100 = vmatpush2.bf16.xpose.msra.mxu0 0
        %1101 = vmatprep.subr.bf16.mxu0 0
        %1102 = vmatpush2.bf16.xpose.msra.mxu0 0
        %1103 = vmatprep.mubr.bf16.mxu0 0
        %1104 = vmatmul.mubr.bf16.gmra.mxu0 %v1066
        %v1105 = vpop.f32.mrf.mxu0
        %v1106 = vadd.f32 0.0, %v1105
        %v1107 = vpop.f32.mrf.mxu0
        %v1108 = vpop.f32.mrf.mxu0
        %v1109 = vpop.f32.mrf.mxu0
        %1110 = vdwg.mxu0
        %v1111 = vsel %vm774, %v1106, -1e+10
        %v1112 = vsel %vm776, %v1111, -inf
        %1113 = vmax.xlane.f32.xlu0 %v1112
        %v1114 = vpop.xlane.xlu0 %1113
        %v1115 = vsub.f32 %v1111, %v1114
        %v1116 = vmul.f32 %v1115, 1.442695
        %v1117 = vpow.pop %v1116
        %v1118 = vsel %vm776, %v1117, 0.0
        %1119 = vadd.xlane.f32.xlu0 %v1118
        %v1120 = vpop.xlane.xlu0 %1119
        %v1121 = vrcp.pop %v1120
        %v1122 = vmul.f32 %v1117, %v1121
        %v1123 = vpack.c.bf16 %v1122, %v1122
        %1124 = vrot.lane.b32.xlu0 %v722, 32
        %v1125 = vpop.permute.xlu0 %1124
        %v1127 = vsel %vm776, %v1123, 0
        %v1130 = vsel %vm792, %v1125, 0
        %1132 = vmatprep.subr.bf16.mxu0 0
        %1133 = vmatpush1.bf16.msra.mxu0 0
        %1134 = vmatprep.subr.bf16.mxu0 0
        %1135 = vmatpush1.bf16.msra.mxu0 0
        %1136 = vmatprep.subr.bf16.mxu0 0
        %1137 = vmatpush1.bf16.msra.mxu0 0
        %1138 = vmatprep.subr.bf16.mxu0 0
        %1139 = vmatpush1.bf16.msra.mxu0 0
        %1140 = vmatprep.subr.bf16.mxu0 0
        %1141 = vmatpush1.bf16.msra.mxu0 0
        %1142 = vmatprep.subr.bf16.mxu0 0
        %1143 = vmatpush1.bf16.msra.mxu0 0
        %1144 = vmatprep.subr.bf16.mxu0 0
        %1145 = vmatpush1.bf16.msra.mxu0 0
        %1146 = vmatprep.subr.bf16.mxu0 0
        %1147 = vmatpush1.bf16.msra.mxu0 %v1130
        %1148 = vmatprep.subr.bf16.mxu0 0
        %1149 = vmatpush2.bf16.msra.mxu0 0
        %1150 = vmatprep.subr.bf16.mxu0 0
        %1151 = vmatpush2.bf16.msra.mxu0 0
        %1152 = vmatprep.subr.bf16.mxu0 0
        %1153 = vmatpush2.bf16.msra.mxu0 0
        %1154 = vmatprep.subr.bf16.mxu0 0
        %1155 = vmatpush2.bf16.msra.mxu0 0
        %1156 = vmatprep.subr.bf16.mxu0 0
        %1157 = vmatpush2.bf16.msra.mxu0 0
        %1158 = vmatprep.subr.bf16.mxu0 0
        %1159 = vmatpush2.bf16.msra.mxu0 0
        %1160 = vmatprep.subr.bf16.mxu0 0
        %1161 = vmatpush2.bf16.msra.mxu0 0
        %1162 = vmatprep.subr.bf16.mxu0 0
        %1163 = vmatpush2.bf16.msra.mxu0 0
        %1164 = vmatprep.mubr.bf16.mxu0 0
        %1165 = vmatmul.mubr.bf16.gmra.mxu0 %v1127
        %v1166 = vpop.f32.mrf.mxu0
        %v1167 = vadd.f32 0.0, %v1166
        %v1168 = vpop.f32.mrf.mxu0
        %v1169 = vpop.f32.mrf.mxu0
        %v1170 = vpop.f32.mrf.mxu0
        %1171 = vdwg.mxu0
        %1173 = vrot.lane.b32.xlu0 %v945, 32
        %v1174 = vpop.permute.xlu0 %1173
        %1177 = vrot.lane.b32.xlu0 %v1056, 64
        %v1178 = vpop.permute.xlu0 %1177
        %1181 = vrot.lane.b32.xlu0 %v1167, 96
        %v1182 = vpop.permute.xlu0 %1181
        %v1184 = vsel %vm723, %v831, %v1174
        %vm1185 = vcmask 523264
        %v1186 = vsel %vm1185, %v1184, %v1178
        %vm1187 = vcmask 785408
        %v1188 = vsel %vm1187, %v1186, %v1182
        %v1189 = vpack.c.bf16 %v1188, %v1188
        %v1190 = vld [vmem:[#allocation10] sm:$0xf]
        %v1191 = vld [vmem:[#allocation10 + $0x4] sm:$0xf]
        %v1192 = vld [vmem:[#allocation10 + $0x8] sm:$0xf]
        %v1193 = vld [vmem:[#allocation10 + $0xc] sm:$0xf]
        %v1194 = vld [vmem:[#allocation10 + $0x10] sm:$0xf]
        %v1195 = vld [vmem:[#allocation10 + $0x14] sm:$0xf]
        %v1196 = vld [vmem:[#allocation10 + $0x18] sm:$0xf]
        %v1197 = vld [vmem:[#allocation10 + $0x1c] sm:$0xf]
        %v1198 = vld [vmem:[#allocation10 + $0x20] sm:$0xf]
        %v1199 = vld [vmem:[#allocation10 + $0x24] sm:$0xf]
        %v1200 = vld [vmem:[#allocation10 + $0x28] sm:$0xf]
        %v1201 = vld [vmem:[#allocation10 + $0x2c] sm:$0xf]
        %v1202 = vld [vmem:[#allocation10 + $0x30] sm:$0xf]
        %v1203 = vld [vmem:[#allocation10 + $0x34] sm:$0xf]
        %v1204 = vld [vmem:[#allocation10 + $0x38] sm:$0xf]
        %v1205 = vld [vmem:[#allocation10 + $0x3c] sm:$0xf]
        %v1206 = vld [vmem:[%s7] sm:$0x1]
        %v1208 = vlaneseq
        %v1209 = vshrl.u32 %v1208, 7
        %v1210 = vsub.s32 0, %v1209
        %v1211 = vrot.slane %v1206, %v1210
        %v1229 = vunpack.c.l.b16 %v1190
        %v1230 = vunpack.c.l.b16 %v1191
        %v1231 = vunpack.c.l.b16 %v1192
        %v1232 = vunpack.c.l.b16 %v1193
        %v1233 = vunpack.c.l.b16 %v1194
        %v1234 = vunpack.c.l.b16 %v1195
        %v1235 = vunpack.c.l.b16 %v1196
        %v1236 = vunpack.c.l.b16 %v1197
        %v1237 = vunpack.c.l.b16 %v1198
        %v1238 = vunpack.c.l.b16 %v1199
        %v1239 = vunpack.c.l.b16 %v1200
        %v1240 = vunpack.c.l.b16 %v1201
        %v1241 = vunpack.c.l.b16 %v1202
        %v1242 = vunpack.c.l.b16 %v1203
        %v1243 = vunpack.c.l.b16 %v1204
        %v1244 = vunpack.c.l.b16 %v1205
        %v1245 = vpack.c.b16 %v1230, %v1229
        %v1246 = vpack.c.b16 %v1232, %v1231
        %v1247 = vpack.c.b16 %v1234, %v1233
        %v1248 = vpack.c.b16 %v1236, %v1235
        %v1249 = vpack.c.b16 %v1238, %v1237
        %v1250 = vpack.c.b16 %v1240, %v1239
        %v1251 = vpack.c.b16 %v1242, %v1241
        %v1252 = vpack.c.b16 %v1244, %v1243
        %1261 = vmatprep.subr.bf16.mxu0 0
        %1262 = vmatpush1.bf16.msra.mxu0 %v1252
        %1263 = vmatprep.subr.bf16.mxu0 0
        %1264 = vmatpush1.bf16.msra.mxu0 %v1251
        %1265 = vmatprep.subr.bf16.mxu0 0
        %1266 = vmatpush1.bf16.msra.mxu0 %v1250
        %1267 = vmatprep.subr.bf16.mxu0 0
        %1268 = vmatpush1.bf16.msra.mxu0 %v1249
        %1269 = vmatprep.subr.bf16.mxu0 0
        %1270 = vmatpush1.bf16.msra.mxu0 %v1248
        %1271 = vmatprep.subr.bf16.mxu0 0
        %1272 = vmatpush1.bf16.msra.mxu0 %v1247
        %1273 = vmatprep.subr.bf16.mxu0 0
        %1274 = vmatpush1.bf16.msra.mxu0 %v1246
        %1275 = vmatprep.subr.bf16.mxu0 0
        %1276 = vmatpush1.bf16.msra.mxu0 %v1245
        %1277 = vmatprep.subr.bf16.mxu0 0
        %1278 = vmatpush2.bf16.msra.mxu0 0
        %1279 = vmatprep.subr.bf16.mxu0 0
        %1280 = vmatpush2.bf16.msra.mxu0 0
        %1281 = vmatprep.subr.bf16.mxu0 0
        %1282 = vmatpush2.bf16.msra.mxu0 0
        %1283 = vmatprep.subr.bf16.mxu0 0
        %1284 = vmatpush2.bf16.msra.mxu0 0
        %1285 = vmatprep.subr.bf16.mxu0 0
        %1286 = vmatpush2.bf16.msra.mxu0 0
        %1287 = vmatprep.subr.bf16.mxu0 0
        %1288 = vmatpush2.bf16.msra.mxu0 0
        %1289 = vmatprep.subr.bf16.mxu0 0
        %1290 = vmatpush2.bf16.msra.mxu0 0
        %1291 = vmatprep.subr.bf16.mxu0 0
        %1292 = vmatpush2.bf16.msra.mxu0 0
        %1293 = vmatprep.mubr.bf16.mxu0 0
        %1294 = vmatmul.mubr.bf16.gmra.mxu0 %v1189
        %v1295 = vpop.f32.mrf.mxu0
        %v1296 = vadd.f32 %v1211, %v1295
        %v1297 = vpop.f32.mrf.mxu0
        %v1298 = vpop.f32.mrf.mxu0
        %v1299 = vpop.f32.mrf.mxu0
        %1300 = vdwg.mxu0
        %v1301 = vadd.f32 %v1296, %v458
        %1302 = vadd.xlane.f32.xlu0 %v1301
        %v1303 = vpop.xlane.xlu0 %1302
        %v1304 = vrcp.pop 128.0
        %v1305 = vmul.f32 %v1303, %v1304
        %v1306 = vsub.f32 %v1301, %v1305
        %v1307 = vmul.f32 %v1306, %v1306
        %1308 = vadd.xlane.f32.xlu0 %v1307
        %v1309 = vpop.xlane.xlu0 %1308
        %v1310 = vmul.f32 %v1309, %v1304
        %v1311 = vadd.f32 %v1310, 1e-05
        %v1312 = vrsqrt.pop %v1311
        %v1313 = vmul.f32 %v1306, %v1312
        %v1314 = vld [vmem:[%s8] sm:$0x1]
        %v1316 = vlaneseq
        %v1317 = vshrl.u32 %v1316, 7
        %v1318 = vsub.s32 0, %v1317
        %v1319 = vrot.slane %v1314, %v1318
        %v1321 = vmul.f32 %v1313, %v1319
        %v1322 = vld [vmem:[%s9] sm:$0x1]
        %v1324 = vlaneseq
        %v1325 = vshrl.u32 %v1324, 7
        %v1326 = vsub.s32 0, %v1325
        %v1327 = vrot.slane %v1322, %v1326
        %v1329 = vadd.f32 %v1321, %v1327
        %v1330 = vpack.c.bf16 %v1329, %v1329
        %1331 = vst [vmem:[%s454] sm:$0xf] %v1330
        %s1332 = sand.u32 %s259, 1
        %s1333 = scalar_lea.sflag [#allocation4], %s1332
        %s1334 = sand.u32 %s259, 1
        %s1335 = smul.addr %s1334, 4
        %s1336 = scalar_lea.vmem [#allocation11], %s1335
        // Predicated region
        $region81: #{tpu_custom_call.1} parent=59 // pred_check
          %p1337 = pneg %p269
        $region82: #{tpu_custom_call.1} parent=59 // pred_check_branch
          %1339 = sbr.rel (%p1337) target = $region84
        $region83: #{tpu_custom_call.1} parent=59 // pred_region
          %s1341 = ssub.s32 64, 64
          %1342 = vsyncadd %s1333, %s1341
          %s1343 = smul.addr %s31, 64
          %s1344 = scalar_lea.hbm %s10, %s1343
          %s1346 = sshll.u32 %s1336, 4
          %s1347 = int_to_ptr.vmem [resolvable:$true] %s1346
          %1349 = dma.vmem_to_hbm [thread:$0]  %s1347, 64, %s1344, %s1333
        $region84: #{tpu_custom_call.1} parent=59 // pred_fallthru
          _
      $region60: #{tpu_custom_call.1} parent=5 // pred_fallthru
        _
      %p1350 = scmp.le.s32.totalorder 2, %s26
      // Predicated region
      $region85: #{tpu_custom_call.1} parent=5 // pred_check
        %p1351 = pneg %p1350
      $region86: #{tpu_custom_call.1} parent=5 // pred_check_branch
        %1353 = sbr.rel (%p1351) target = $region88
      $region87: #{tpu_custom_call.1} parent=5 // pred_region
        %s1354 = ssub.s32 %s26, 2
        // Predicated region
        $region89: #{tpu_custom_call.1} parent=87 // pred_check
          %p1355 = pneg %p275
        $region90: #{tpu_custom_call.1} parent=87 // pred_check_branch
          %1357 = sbr.rel (%p1355) target = $region92
        $region91: #{tpu_custom_call.1} parent=87 // pred_region
          %s1358 = sand.u32 %s260, 1
          %s1359 = scalar_lea.sflag [#allocation4], %s1358
          %s1360 = sand.u32 %s260, 1
          %s1361 = smul.addr %s1360, 4
          %s1362 = scalar_lea.vmem [#allocation11], %s1361
          %1363 = dma.done %s1359, 64
        $region92: #{tpu_custom_call.1} parent=87 // pred_fallthru
          _
      $region88: #{tpu_custom_call.1} parent=5 // pred_fallthru
        _
    $region6: #{tpu_custom_call.1} parent=1 // loop_footer
      %s30 = sadd.s32 1, %s26
    $region7: #{tpu_custom_call.1} parent=1 // loop_footer_branch
      %25 = sbr.rel target = $region3
    $region8: #{tpu_custom_call.1} parent=1 // loop_exit
      _
    %1364 = vsyncpa [#allocation3], 1
    %s1365 = scalar_lea.sflag [#allocation3], 1
    %1366 = vsyncpa %s1365, 1
    %1367 = vsyncpa [#allocation6], 1
    %s1368 = scalar_lea.sflag [#allocation6], 1
    %1369 = vsyncpa %s1368, 1
    %1370 = vsyncpa [#allocation9], 1
    %1371 = vsyncpa [#allocation4], 1
    %s1372 = scalar_lea.sflag [#allocation4], 1
    %1373 = vsyncpa %s1372, 1

</llo_original>
